<compile_context>
chip_gen: v7x
topology: tpu7x:2x2x1
jax: 0.10.0
libtpu: 0.0.40
codegen_flags: <defaults>
</compile_context>

<pallas_src>
import functools

import jax
import jax.numpy as jnp
from jax import lax
from jax.experimental import pallas as pl
from jax.experimental.pallas import tpu as pltpu


def mhsa_kernel(x_ref, wq_ref, bq_ref, wkv_ref, bkv_ref, wo_ref, bo_ref, o_ref,
                k_scr, v_scr, *, head, embed_dim, inv_sqrt_d, q_tile, num_q_tiles):
    E = embed_dim
    hd = E // head
    T = x_ref.shape[1]
    qi = pl.program_id(1)

    # --- K/V projection: once per batch element (qi == 0), reused by all q-tiles. ---
    @pl.when(qi == 0)
    def _():
        xf = x_ref[0]                                               # (T, F), native dtype
        kv = lax.dot_general(xf, wkv_ref[...], (((1,), (1,)), ((), ())),
                             preferred_element_type=jnp.float32)    # (T, 2E), f32 acc
        kv = (kv + bkv_ref[...]).astype(k_scr.dtype)                # back to activation dtype
        # Head-major layout done once per batch element, not once per q-tile.
        k_scr[...] = jnp.transpose(kv[:, :E].reshape(T, head, hd), (1, 0, 2))   # (h, T, hd)
        v_scr[...] = jnp.transpose(kv[:, E:].reshape(T, head, hd), (1, 0, 2))   # (h, T, hd)

    # --- Q projection: only the TQ rows of this tile (slice x BEFORE the matmul). ---
    if num_q_tiles == 1:
        x_t = x_ref[0]                                              # (TQ == T, F)
    else:
        start = pl.multiple_of(qi * q_tile, q_tile)
        x_t = x_ref[0, pl.ds(start, q_tile), :]                     # (TQ, F)

    q = lax.dot_general(x_t, wq_ref[...], (((1,), (1,)), ((), ())),
                        preferred_element_type=jnp.float32)         # (TQ, E), f32 acc
    # Fold 1/sqrt(features) into q (TQ*E elems, not TQ*T scores).
    q = (q + bq_ref[...]) * inv_sqrt_d
    q3 = jnp.transpose(q.reshape(q_tile, head, hd), (1, 0, 2)).astype(k_scr.dtype)  # (h, TQ, hd)

    # --- Attention, batched over heads; softmax statistics stay in f32. ---
    s = jnp.einsum('hqd,hkd->hqk', q3, k_scr[...],
                   preferred_element_type=jnp.float32)              # (h, TQ, T)
    s = s - jnp.max(s, axis=-1, keepdims=True)
    p = jnp.exp(s)
    l = jnp.sum(p, axis=-1, keepdims=True)                          # (h, TQ, 1)

    ctx = jnp.einsum('hqk,hkd->hqd', p.astype(v_scr.dtype), v_scr[...],
                     preferred_element_type=jnp.float32)            # (h, TQ, hd)
    # Deferred softmax normalization on the small context tensor (EUP reciprocal).
    ctx = ctx * pl.reciprocal(l, approx=True)
    ctx = jnp.transpose(ctx, (1, 0, 2)).reshape(q_tile, E).astype(wo_ref.dtype)

    # --- Output projection (contraction over E, no transposed weight). ---
    out = lax.dot_general(ctx, wo_ref[...], (((1,), (1,)), ((), ())),
                          preferred_element_type=jnp.float32)       # (TQ, F)
    # Dropout(p=0.0) == identity.
    o_ref[0] = (out + bo_ref[...]).astype(o_ref.dtype)


def multi_head_self_attention(x, params, *, head, q_tile=256):
    # q_tile=256 fills the 256-row MXU on v6e/v7x; use q_tile=128 on v5e.
    B, T, F = x.shape
    E = params["wq"].shape[0]
    assert E % head == 0
    hd = E // head

    TQ = T if T <= q_tile else q_tile
    assert T % TQ == 0, "sequence length must be divisible by the query tile"
    nq = T // TQ

    # Q kept separate (projected per tile); K/V fused (projected once per batch).
    wq, bq = params["wq"], params["bq"]                                  # (E, F), (1, E)
    wkv = jnp.concatenate([params["wk"], params["wv"]], axis=0)          # (2E, F)
    bkv = jnp.concatenate([params["bk"], params["bv"]], axis=1)          # (1, 2E)
    wo, bo = params["wo"], params["bo"]                                  # (F, E), (1, F)

    kernel = functools.partial(
        mhsa_kernel, head=head, embed_dim=E,
        inv_sqrt_d=1.0 / (float(F) ** 0.5),   # module scales by sqrt(features)
        q_tile=TQ, num_q_tiles=nq)

    return pl.pallas_call(
        kernel,
        out_shape=jax.ShapeDtypeStruct((B, T, F), x.dtype),
        grid=(B, nq),
        in_specs=[
            pl.BlockSpec((1, T, F), lambda b, qi: (b, 0, 0)),    # x: full seq, fetched once per b
            pl.BlockSpec((E, F), lambda b, qi: (0, 0)),          # Wq
            pl.BlockSpec((1, E), lambda b, qi: (0, 0)),          # bq
            pl.BlockSpec((2 * E, F), lambda b, qi: (0, 0)),      # fused Wkv
            pl.BlockSpec((1, 2 * E), lambda b, qi: (0, 0)),      # fused bkv
            pl.BlockSpec((F, E), lambda b, qi: (0, 0)),          # Wo
            pl.BlockSpec((1, F), lambda b, qi: (0, 0)),          # bo
        ],
        out_specs=pl.BlockSpec((1, TQ, F), lambda b, qi: (b, qi, 0)),
        scratch_shapes=[
            pltpu.VMEM((head, T, hd), x.dtype),                  # K, head-major, per-batch reuse
            pltpu.VMEM((head, T, hd), x.dtype),                  # V, head-major, per-batch reuse
        ],
        compiler_params=pltpu.CompilerParams(
            # Batch axis parallel (megacore / v7x 2-TC sharding); q-tile axis must be
            # "arbitrary" so the K/V scratch legally carries across q-tiles.
            dimension_semantics=("parallel", "arbitrary"),
            # 48 MiB leaves headroom on v7x (64 MiB physical/TC); fine on v5e/v6e (128 MiB).
            vmem_limit_bytes=48 * 1024 * 1024),
    )(x, wq, bq, wkv, bkv, wo, bo)


def reference_mhsa(x, params, *, head):
    """Pure-JAX reference mirroring the PyTorch forward exactly."""
    B, T, F = x.shape
    E = params["wq"].shape[0]
    hd = E // head
    sqrt_d = float(F) ** 0.5
    xf = x.astype(jnp.float32)
    q = xf @ params["wq"].T + params["bq"]
    k = xf @ params["wk"].T + params["bk"]
    v = xf @ params["wv"].T + params["bv"]
    q = q.reshape(B, T, head, hd).transpose(0, 2, 1, 3)
    k = k.reshape(B, T, head, hd).transpose(0, 2, 1, 3)
    v = v.reshape(B, T, head, hd).transpose(0, 2, 1, 3)
    attn_map = jax.nn.softmax(jnp.einsum("bhif,bhjf->bhij", q, k) / sqrt_d, axis=-1)
    attn = jnp.einsum("bhij,bhjf->bihf", attn_map, v)          # (B, T, head, hd)
    attn = attn.reshape(B, T, E)
    return (attn @ params["wo"].T + params["bo"][0]).astype(x.dtype)


def init_params(key, features, embed_dim):
    """Deterministic nn.Linear-style init: U(-1/sqrt(fan_in), 1/sqrt(fan_in))."""
    ks = jax.random.split(key, 8)

    def lin(kw, kb, fan_out, fan_in):
        bound = 1.0 / (fan_in ** 0.5)
        w = jax.random.uniform(kw, (fan_out, fan_in), jnp.float32, -bound, bound)
        b = jax.random.uniform(kb, (1, fan_out), jnp.float32, -bound, bound)
        return w, b

    wq, bq = lin(ks[0], ks[1], embed_dim, features)
    wk, bk = lin(ks[2], ks[3], embed_dim, features)
    wv, bv = lin(ks[4], ks[5], embed_dim, features)
    wo, bo = lin(ks[6], ks[7], features, embed_dim)
    return dict(wq=wq, bq=bq, wk=wk, bk=bk, wv=wv, bv=bv, wo=wo, bo=bo)


if __name__ == "__main__":
    key = jax.random.PRNGKey(0)
    kx, kp, kx2 = jax.random.split(key, 3)

    features, embed_dim, head = 32, 32, 4
    params = init_params(kp, features, embed_dim)

    # Case 1: single query tile (B=2, T=8).
    B, T = 2, 8
    x = jax.random.normal(kx, (B, T, features), dtype=jnp.float32)
    out = jax.block_until_ready(multi_head_self_attention(x, params, head=head))
    ref = reference_mhsa(x, params, head=head)
    assert out.shape == (B, T, features)
    # Tolerance covers the approximate EUP reciprocal (~2^-12 rel) in the softmax
    # normalization; all matmuls accumulate in f32.
    assert jnp.allclose(out, ref, atol=2e-3, rtol=2e-3), float(jnp.max(jnp.abs(out - ref)))

    # Case 2: multiple query tiles (B=1, T=32, q_tile=8) -- exercises the per-tile Q
    # projection and the K/V scratch reuse across qi.
    T2 = 32
    x2 = jax.random.normal(kx2, (1, T2, features), dtype=jnp.float32)
    out2 = jax.block_until_ready(
        multi_head_self_attention(x2, params, head=head, q_tile=8))
    ref2 = reference_mhsa(x2, params, head=head)
    assert out2.shape == (1, T2, features)
    assert jnp.allclose(out2, ref2, atol=2e-3, rtol=2e-3), float(jnp.max(jnp.abs(out2 - ref2)))

    print("KERNEL_OK")
</pallas_src>

<mosaic_0001>
module attributes {stable_mosaic.version = 11 : i64} {
  func.func @mhsa_kernel(%arg0: i32, %arg1: i32, %arg2: memref<1x8x32xf32, #tpu.memory_space<vmem>>, %arg3: memref<32x32xf32, #tpu.memory_space<vmem>>, %arg4: memref<1x32xf32, #tpu.memory_space<vmem>>, %arg5: memref<64x32xf32, #tpu.memory_space<vmem>>, %arg6: memref<1x64xf32, #tpu.memory_space<vmem>>, %arg7: memref<32x32xf32, #tpu.memory_space<vmem>>, %arg8: memref<1x32xf32, #tpu.memory_space<vmem>>, %arg9: memref<1x8x32xf32, #tpu.memory_space<vmem>>, %arg10: memref<4x8x8xf32, #tpu.memory_space<vmem>>, %arg11: memref<4x8x8xf32, #tpu.memory_space<vmem>>) attributes {dimension_semantics = [#tpu.dimension_semantics<parallel>, #tpu.dimension_semantics<arbitrary>], iteration_bounds = array<i64: 2, 1>, scalar_prefetch = 0 : i64, scratch_operands = 2 : i64, tpu.core_type = #tpu.core_type<tc>, window_params = [{transform_indices = @transform_0, window_bounds = array<i64: 1, 8, 32>}, {pipeline_mode = #tpu.pipeline_mode<synchronous>, transform_indices = @transform_1, window_bounds = array<i64: 32, 32>}, {pipeline_mode = #tpu.pipeline_mode<synchronous>, transform_indices = @transform_2, window_bounds = array<i64: 1, 32>}, {pipeline_mode = #tpu.pipeline_mode<synchronous>, transform_indices = @transform_3, window_bounds = array<i64: 64, 32>}, {pipeline_mode = #tpu.pipeline_mode<synchronous>, transform_indices = @transform_4, window_bounds = array<i64: 1, 64>}, {pipeline_mode = #tpu.pipeline_mode<synchronous>, transform_indices = @transform_5, window_bounds = array<i64: 32, 32>}, {pipeline_mode = #tpu.pipeline_mode<synchronous>, transform_indices = @transform_6, window_bounds = array<i64: 1, 32>}, {transform_indices = @transform_7, window_bounds = array<i64: 1, 8, 32>}]} {
    %c0_i32 = arith.constant 0 : i32
    %0 = arith.cmpi eq, %arg1, %c0_i32 : i32
    %1 = arith.extui %0 : i1 to i32
    %c0_i32_0 = arith.constant 0 : i32
    %2 = arith.cmpi ne, %1, %c0_i32_0 : i32
    scf.if %2 {
      %c0_26 = arith.constant 0 : index
      %c0_27 = arith.constant 0 : index
      %c0_28 = arith.constant 0 : index
      %38 = vector.load %arg2[%c0_26, %c0_27, %c0_28] : memref<1x8x32xf32, #tpu.memory_space<vmem>>, vector<1x8x32xf32>
      %39 = vector.shape_cast %38 : vector<1x8x32xf32> to vector<8x32xf32>
      %c0_29 = arith.constant 0 : index
      %c0_30 = arith.constant 0 : index
      %40 = vector.load %arg5[%c0_29, %c0_30] : memref<64x32xf32, #tpu.memory_space<vmem>>, vector<64x32xf32>
      %cst_31 = arith.constant dense<0.000000e+00> : vector<8x64xf32>
      %41 = tpu.matmul %39, %40, %cst_31 {dimension_numbers = #tpu.dot_dimension_numbers<[1], [1], [0], [0], [0, 0, 1, 0], [], []>} : vector<8x32xf32>, vector<64x32xf32>, vector<8x64xf32> -> vector<8x64xf32>
      %c0_32 = arith.constant 0 : index
      %c0_33 = arith.constant 0 : index
      %42 = vector.load %arg6[%c0_32, %c0_33] : memref<1x64xf32, #tpu.memory_space<vmem>>, vector<1x64xf32>
      %43 = vector.broadcast %42 : vector<1x64xf32> to vector<8x64xf32>
      %44 = arith.addf %41, %43 : vector<8x64xf32>
      %45 = vector.extract_strided_slice %44 {offsets = [0, 0], sizes = [8, 32], strides = [1, 1]} : vector<8x64xf32> to vector<8x32xf32>
      %46 = vector.shape_cast %45 : vector<8x32xf32> to vector<8x4x8xf32>
      %47 = tpu.transpose %46, [1, 0, 2] : vector<8x4x8xf32> -> vector<4x8x8xf32>
      %c0_34 = arith.constant 0 : index
      %c0_35 = arith.constant 0 : index
      %c0_36 = arith.constant 0 : index
      %48 = vector.load %arg10[%c0_34, %c0_35, %c0_36] : memref<4x8x8xf32, #tpu.memory_space<vmem>>, vector<4x8x8xf32>
      tpu.vector_store %arg10[%c0_34, %c0_35, %c0_36], %47 {strides = array<i32>} : memref<4x8x8xf32, #tpu.memory_space<vmem>>, vector<4x8x8xf32>,
      %49 = vector.extract_strided_slice %44 {offsets = [0, 32], sizes = [8, 32], strides = [1, 1]} : vector<8x64xf32> to vector<8x32xf32>
      %50 = vector.shape_cast %49 : vector<8x32xf32> to vector<8x4x8xf32>
      %51 = tpu.transpose %50, [1, 0, 2] : vector<8x4x8xf32> -> vector<4x8x8xf32>
      %c0_37 = arith.constant 0 : index
      %c0_38 = arith.constant 0 : index
      %c0_39 = arith.constant 0 : index
      %52 = vector.load %arg11[%c0_37, %c0_38, %c0_39] : memref<4x8x8xf32, #tpu.memory_space<vmem>>, vector<4x8x8xf32>
      tpu.vector_store %arg11[%c0_37, %c0_38, %c0_39], %51 {strides = array<i32>} : memref<4x8x8xf32, #tpu.memory_space<vmem>>, vector<4x8x8xf32>,
    } else {
    }
    %c0 = arith.constant 0 : index
    %c0_1 = arith.constant 0 : index
    %c0_2 = arith.constant 0 : index
    %3 = vector.load %arg2[%c0, %c0_1, %c0_2] : memref<1x8x32xf32, #tpu.memory_space<vmem>>, vector<1x8x32xf32>
    %4 = vector.shape_cast %3 : vector<1x8x32xf32> to vector<8x32xf32>
    %c0_3 = arith.constant 0 : index
    %c0_4 = arith.constant 0 : index
    %5 = vector.load %arg3[%c0_3, %c0_4] : memref<32x32xf32, #tpu.memory_space<vmem>>, vector<32x32xf32>
    %cst = arith.constant dense<0.000000e+00> : vector<8x32xf32>
    %6 = tpu.matmul %4, %5, %cst {dimension_numbers = #tpu.dot_dimension_numbers<[1], [1], [0], [0], [0, 0, 1, 0], [], []>} : vector<8x32xf32>, vector<32x32xf32>, vector<8x32xf32> -> vector<8x32xf32>
    %c0_5 = arith.constant 0 : index
    %c0_6 = arith.constant 0 : index
    %7 = vector.load %arg4[%c0_5, %c0_6] : memref<1x32xf32, #tpu.memory_space<vmem>>, vector<1x32xf32>
    %8 = vector.broadcast %7 : vector<1x32xf32> to vector<8x32xf32>
    %9 = arith.addf %6, %8 : vector<8x32xf32>
    %cst_7 = arith.constant 0.176776692 : f32
    %10 = vector.broadcast %cst_7 : f32 to vector<8x32xf32>
    %11 = arith.mulf %9, %10 : vector<8x32xf32>
    %12 = vector.shape_cast %11 : vector<8x32xf32> to vector<8x4x8xf32>
    %13 = tpu.transpose %12, [1, 0, 2] : vector<8x4x8xf32> -> vector<4x8x8xf32>
    %c0_8 = arith.constant 0 : index
    %c0_9 = arith.constant 0 : index
    %c0_10 = arith.constant 0 : index
    %14 = vector.load %arg10[%c0_8, %c0_9, %c0_10] : memref<4x8x8xf32, #tpu.memory_space<vmem>>, vector<4x8x8xf32>
    "tpu.trace_start"() <{level = 10 : i32, message = "hqd,hkd->hqk"}> : () -> ()
    %cst_11 = arith.constant dense<0.000000e+00> : vector<4x8x8xf32>
    %15 = tpu.matmul %13, %14, %cst_11 {dimension_numbers = #tpu.dot_dimension_numbers<[2], [2], [1], [1], [0, 0, 0, 1, 1, 1], [0], [0]>} : vector<4x8x8xf32>, vector<4x8x8xf32>, vector<4x8x8xf32> -> vector<4x8x8xf32>
    "tpu.trace_stop"() : () -> ()
    %cst_12 = arith.constant dense<0xFF800000> : vector<4x8xf32>
    %16 = vector.multi_reduction <maximumf>, %15, %cst_12 [2] : vector<4x8x8xf32> to vector<4x8xf32>
    %17 = vector.shape_cast %16 : vector<4x8xf32> to vector<4x8x1xf32>
    %18 = vector.broadcast %17 : vector<4x8x1xf32> to vector<4x8x8xf32>
    %19 = arith.subf %15, %18 : vector<4x8x8xf32>
    %20 = math.exp %19 : vector<4x8x8xf32>
    %cst_13 = arith.constant dense<0.000000e+00> : vector<4x8xf32>
    %21 = vector.multi_reduction <add>, %20, %cst_13 [2] : vector<4x8x8xf32> to vector<4x8xf32>
    %22 = vector.shape_cast %21 : vector<4x8xf32> to vector<4x8x1xf32>
    %c0_14 = arith.constant 0 : index
    %c0_15 = arith.constant 0 : index
    %c0_16 = arith.constant 0 : index
    %23 = vector.load %arg11[%c0_14, %c0_15, %c0_16] : memref<4x8x8xf32, #tpu.memory_space<vmem>>, vector<4x8x8xf32>
    "tpu.trace_start"() <{level = 10 : i32, message = "hqk,hkd->hqd"}> : () -> ()
    %cst_17 = arith.constant dense<0.000000e+00> : vector<4x8x8xf32>
    %24 = tpu.matmul %20, %23, %cst_17 {dimension_numbers = #tpu.dot_dimension_numbers<[2], [1], [1], [2], [0, 0, 0, 1, 1, 2], [0], [0]>} : vector<4x8x8xf32>, vector<4x8x8xf32>, vector<4x8x8xf32> -> vector<4x8x8xf32>
    "tpu.trace_stop"() : () -> ()
    %25 = tpu.reciprocal %22 {approx = true} : vector<4x8x1xf32> -> vector<4x8x1xf32>
    %26 = vector.broadcast %25 : vector<4x8x1xf32> to vector<4x8x8xf32>
    %27 = arith.mulf %24, %26 : vector<4x8x8xf32>
    %28 = tpu.transpose %27, [1, 0, 2] : vector<4x8x8xf32> -> vector<8x4x8xf32>
    %29 = vector.shape_cast %28 : vector<8x4x8xf32> to vector<8x32xf32>
    %c0_18 = arith.constant 0 : index
    %c0_19 = arith.constant 0 : index
    %30 = vector.load %arg7[%c0_18, %c0_19] : memref<32x32xf32, #tpu.memory_space<vmem>>, vector<32x32xf32>
    %cst_20 = arith.constant dense<0.000000e+00> : vector<8x32xf32>
    %31 = tpu.matmul %29, %30, %cst_20 {dimension_numbers = #tpu.dot_dimension_numbers<[1], [1], [0], [0], [0, 0, 1, 0], [], []>} : vector<8x32xf32>, vector<32x32xf32>, vector<8x32xf32> -> vector<8x32xf32>
    %c0_21 = arith.constant 0 : index
    %c0_22 = arith.constant 0 : index
    %32 = vector.load %arg8[%c0_21, %c0_22] : memref<1x32xf32, #tpu.memory_space<vmem>>, vector<1x32xf32>
    %33 = vector.broadcast %32 : vector<1x32xf32> to vector<8x32xf32>
    %34 = arith.addf %31, %33 : vector<8x32xf32>
    %c0_23 = arith.constant 0 : index
    %c0_24 = arith.constant 0 : index
    %c0_25 = arith.constant 0 : index
    %35 = vector.load %arg9[%c0_23, %c0_24, %c0_25] : memref<1x8x32xf32, #tpu.memory_space<vmem>>, vector<1x8x32xf32>
    %36 = vector.shape_cast %35 : vector<1x8x32xf32> to vector<8x32xf32>
    %37 = vector.shape_cast %34 : vector<8x32xf32> to vector<1x8x32xf32>
    tpu.vector_store %arg9[%c0_23, %c0_24, %c0_25], %37 {strides = array<i32>} : memref<1x8x32xf32, #tpu.memory_space<vmem>>, vector<1x8x32xf32>,
    return
  }
  func.func @transform_0(%arg0: i32, %arg1: i32) -> (i32, i32, i32) {
    %c0_i32 = arith.constant 0 : i32
    %c0_i32_0 = arith.constant 0 : i32
    %c0_i32_1 = arith.constant 0 : i32
    return %arg0, %c0_i32, %c0_i32_0 : i32, i32, i32
  }
  func.func @transform_1(%arg0: i32, %arg1: i32) -> (i32, i32) {
    %c0_i32 = arith.constant 0 : i32
    %c0_i32_0 = arith.constant 0 : i32
    %c0_i32_1 = arith.constant 0 : i32
    return %c0_i32, %c0_i32_0 : i32, i32
  }
  func.func @transform_2(%arg0: i32, %arg1: i32) -> (i32, i32) {
    %c0_i32 = arith.constant 0 : i32
    %c0_i32_0 = arith.constant 0 : i32
    %c0_i32_1 = arith.constant 0 : i32
    return %c0_i32, %c0_i32_0 : i32, i32
  }
  func.func @transform_3(%arg0: i32, %arg1: i32) -> (i32, i32) {
    %c0_i32 = arith.constant 0 : i32
    %c0_i32_0 = arith.constant 0 : i32
    %c0_i32_1 = arith.constant 0 : i32
    return %c0_i32, %c0_i32_0 : i32, i32
  }
  func.func @transform_4(%arg0: i32, %arg1: i32) -> (i32, i32) {
    %c0_i32 = arith.constant 0 : i32
    %c0_i32_0 = arith.constant 0 : i32
    %c0_i32_1 = arith.constant 0 : i32
    return %c0_i32, %c0_i32_0 : i32, i32
  }
  func.func @transform_5(%arg0: i32, %arg1: i32) -> (i32, i32) {
    %c0_i32 = arith.constant 0 : i32
    %c0_i32_0 = arith.constant 0 : i32
    %c0_i32_1 = arith.constant 0 : i32
    return %c0_i32, %c0_i32_0 : i32, i32
  }
  func.func @transform_6(%arg0: i32, %arg1: i32) -> (i32, i32) {
    %c0_i32 = arith.constant 0 : i32
    %c0_i32_0 = arith.constant 0 : i32
    %c0_i32_1 = arith.constant 0 : i32
    return %c0_i32, %c0_i32_0 : i32, i32
  }
  func.func @transform_7(%arg0: i32, %arg1: i32) -> (i32, i32, i32) {
    %c0_i32 = arith.constant 0 : i32
    %c0_i32_0 = arith.constant 0 : i32
    return %arg0, %arg1, %c0_i32 : i32, i32, i32
  }
}

</mosaic_0001>

<llo_original>
// kernel: tpu_custom_call.1
$region0: #{tpu_custom_call.1}
  #allocation0 [shape = 'u32[]', space=smem, size = 0x4, offset = 0x4, fixed_abs, tag = 'smem constant byte address 0x4 - core index']
  #allocation1 [shape = 'u32[144,128]{1,0:T(1,128)}', space=vmem, size = 0x12000, scoped, tag = 'internal scratch']
  #allocation2 [shape = 'f32[4,8,8]{2,1,0:T(8,128)}', space=vmem, size = 0x4000, scoped, tag = 'scratch operand']
  #allocation3 [shape = 'f32[4,8,8]{2,1,0:T(8,128)}', space=vmem, size = 0x4000, scoped, tag = 'scratch operand']
  %s0 = inlined_call_operand.vmem [shape: f32[2,8,32], index: 0, kind: input, shape index: {}]
  %s1 = inlined_call_operand.vmem [shape: f32[32,32], index: 1, kind: input, shape index: {}]
  %s2 = inlined_call_operand.vmem [shape: f32[1,32], index: 2, kind: input, shape index: {}]
  %s3 = inlined_call_operand.vmem [shape: f32[64,32], index: 3, kind: input, shape index: {}]
  %s4 = inlined_call_operand.vmem [shape: f32[1,64], index: 4, kind: input, shape index: {}]
  %s5 = inlined_call_operand.vmem [shape: f32[32,32], index: 5, kind: input, shape index: {}]
  %s6 = inlined_call_operand.vmem [shape: f32[1,32], index: 6, kind: input, shape index: {}]
  %s7 = inlined_call_operand.hbm [shape: f32[2,8,32], index: 7, kind: output, shape index: {}]
  %s8 = sld [smem:[#allocation0]]
  $region65: #{tpu_custom_call.1} parent=0
    _
  %s10 = ssub.s32 1, %s8
  %s11 = scalar_select 0, %s10, %s8
  $region1: #{tpu_custom_call.1} parent=0
    #allocation4 [shape = 'u8[8192]{0}', space=vmem, size = 0x2000, scoped, tag = 'output window, operand 0']
    #allocation5 [shape = 's32[2]{0}', space=sflag, size = 0x8, scoped, tag = 'scoped memory for tpu_custom_call.1']
    %12 = vsyncpa [#allocation5], 0
    %s13 = scalar_lea.sflag [#allocation5], 1
    %14 = vsyncpa %s13, 0
    loop: start=0, step=1, limit=4
    $region2: #{tpu_custom_call.1} parent=1 // loop_pre_header
      _
    $region3: #{tpu_custom_call.1} parent=1 // loop_header
      %s16 = sphi 0, %s20
      %p17 = scmp.ge.s32.totalorder %s16, 4
      %s23 = sphi 0, %s35
      %s24 = sphi 0, %s31
      %s25 = sphi 0, %s23
      %s26 = sphi 0, %s24
      %s27 = sphi 0, %s25
      %s28 = sphi 0, %s26
      %s38 = sphi 0, %s40
      %s41 = sphi 0, %s38
      %s42 = sphi 0, %s41
      %s58 = sphi 0, %s42
      %s62 = sphi 0, %s62
      %s64 = sphi 0, %s62
      %s65 = sphi 0, %s64
      %s79 = sphi 0, %s65
      %s83 = sphi 0, %s83
      %s85 = sphi 0, %s83
      %s86 = sphi 0, %s85
      %s100 = sphi 0, %s86
      %s104 = sphi 0, %s104
      %s106 = sphi 0, %s104
      %s107 = sphi 0, %s106
      %s121 = sphi 0, %s107
      %s125 = sphi 0, %s125
      %s127 = sphi 0, %s125
      %s128 = sphi 0, %s127
      %s142 = sphi 0, %s128
      %s146 = sphi 0, %s146
      %s148 = sphi 0, %s146
      %s149 = sphi 0, %s148
      %s163 = sphi 0, %s149
      %s167 = sphi 0, %s167
      %s169 = sphi 0, %s167
      %s170 = sphi 0, %s169
      %s184 = sphi 0, %s170
      %s192 = sphi 0, %s194
      %s195 = sphi 0, %s192
      %s196 = sphi 0, %s195
      %s212 = sphi 0, %s196
    $region4: #{tpu_custom_call.1} parent=1 // loop_header_branch
      %19 = sbr.rel (%p17) target = $region8
    $region5: #{tpu_custom_call.1} parent=1 // loop_body
      %s21 = ssub.s32 %s16, 1
      %s22 = ssub.s32 %s16, 2
      %s29 = sadd.s32 1, %s24
      %p30 = scmp.ge.s32.totalorder %s29, 1
      %s31 = scalar_select %p30, 0, %s29
      %s32 = sadd.s32 1, %s23
      %s33 = scalar_select %p30, %s32, %s23
      %p34 = scmp.ge.s32.totalorder %s33, 2
      %s35 = scalar_select %p34, 0, %s33
      %s36 = ssub.s32 %s23, %s35
      %p37 = scmp.eq.s32.totalorder %s36, 0
      %s39 = sadd.s32 %s38, 1
      %s40 = scalar_select %p37, %s38, %s39
      %p43 = pneg %p37
      %p44 = scmp.eq.s32.totalorder %s16, 1
      %p45 = por %p43, %p44
      %p46 = scmp.ne.s32.totalorder %s38, %s41
      %p47 = scmp.eq.s32.totalorder %s16, 0
      %p48 = por %p46, %p47
      %p49 = scmp.ne.s32.totalorder %s38, %s41
      %p50 = scmp.eq.s32.totalorder %s21, 1
      %p51 = por %p49, %p50
      %p52 = scmp.ne.s32.totalorder %s41, %s42
      %p53 = scmp.eq.s32.totalorder %s21, 0
      %p54 = por %p52, %p53
      %p55 = scmp.ne.s32.totalorder %s41, %s42
      %p56 = scmp.eq.s32.totalorder %s22, 1
      %p57 = por %p55, %p56
      %p59 = scmp.ne.s32.totalorder %s42, %s58
      %p60 = scmp.eq.s32.totalorder %s22, 0
      %p61 = por %p59, %p60
      %s63 = sadd.s32 %s62, 1
      %p66 = scmp.eq.s32.totalorder %s16, 1
      %p67 = scmp.ne.s32.totalorder %s62, %s64
      %p68 = scmp.eq.s32.totalorder %s16, 0
      %p69 = por %p67, %p68
      %p70 = scmp.ne.s32.totalorder %s62, %s64
      %p71 = scmp.eq.s32.totalorder %s21, 1
      %p72 = por %p70, %p71
      %p73 = scmp.ne.s32.totalorder %s64, %s65
      %p74 = scmp.eq.s32.totalorder %s21, 0
      %p75 = por %p73, %p74
      %p76 = scmp.ne.s32.totalorder %s64, %s65
      %p77 = scmp.eq.s32.totalorder %s22, 1
      %p78 = por %p76, %p77
      %p80 = scmp.ne.s32.totalorder %s65, %s79
      %p81 = scmp.eq.s32.totalorder %s22, 0
      %p82 = por %p80, %p81
      %s84 = sadd.s32 %s83, 1
      %p87 = scmp.eq.s32.totalorder %s16, 1
      %p88 = scmp.ne.s32.totalorder %s83, %s85
      %p89 = scmp.eq.s32.totalorder %s16, 0
      %p90 = por %p88, %p89
      %p91 = scmp.ne.s32.totalorder %s83, %s85
      %p92 = scmp.eq.s32.totalorder %s21, 1
      %p93 = por %p91, %p92
      %p94 = scmp.ne.s32.totalorder %s85, %s86
      %p95 = scmp.eq.s32.totalorder %s21, 0
      %p96 = por %p94, %p95
      %p97 = scmp.ne.s32.totalorder %s85, %s86
      %p98 = scmp.eq.s32.totalorder %s22, 1
      %p99 = por %p97, %p98
      %p101 = scmp.ne.s32.totalorder %s86, %s100
      %p102 = scmp.eq.s32.totalorder %s22, 0
      %p103 = por %p101, %p102
      %s105 = sadd.s32 %s104, 1
      %p108 = scmp.eq.s32.totalorder %s16, 1
      %p109 = scmp.ne.s32.totalorder %s104, %s106
      %p110 = scmp.eq.s32.totalorder %s16, 0
      %p111 = por %p109, %p110
      %p112 = scmp.ne.s32.totalorder %s104, %s106
      %p113 = scmp.eq.s32.totalorder %s21, 1
      %p114 = por %p112, %p113
      %p115 = scmp.ne.s32.totalorder %s106, %s107
      %p116 = scmp.eq.s32.totalorder %s21, 0
      %p117 = por %p115, %p116
      %p118 = scmp.ne.s32.totalorder %s106, %s107
      %p119 = scmp.eq.s32.totalorder %s22, 1
      %p120 = por %p118, %p119
      %p122 = scmp.ne.s32.totalorder %s107, %s121
      %p123 = scmp.eq.s32.totalorder %s22, 0
      %p124 = por %p122, %p123
      %s126 = sadd.s32 %s125, 1
      %p129 = scmp.eq.s32.totalorder %s16, 1
      %p130 = scmp.ne.s32.totalorder %s125, %s127
      %p131 = scmp.eq.s32.totalorder %s16, 0
      %p132 = por %p130, %p131
      %p133 = scmp.ne.s32.totalorder %s125, %s127
      %p134 = scmp.eq.s32.totalorder %s21, 1
      %p135 = por %p133, %p134
      %p136 = scmp.ne.s32.totalorder %s127, %s128
      %p137 = scmp.eq.s32.totalorder %s21, 0
      %p138 = por %p136, %p137
      %p139 = scmp.ne.s32.totalorder %s127, %s128
      %p140 = scmp.eq.s32.totalorder %s22, 1
      %p141 = por %p139, %p140
      %p143 = scmp.ne.s32.totalorder %s128, %s142
      %p144 = scmp.eq.s32.totalorder %s22, 0
      %p145 = por %p143, %p144
      %s147 = sadd.s32 %s146, 1
      %p150 = scmp.eq.s32.totalorder %s16, 1
      %p151 = scmp.ne.s32.totalorder %s146, %s148
      %p152 = scmp.eq.s32.totalorder %s16, 0
      %p153 = por %p151, %p152
      %p154 = scmp.ne.s32.totalorder %s146, %s148
      %p155 = scmp.eq.s32.totalorder %s21, 1
      %p156 = por %p154, %p155
      %p157 = scmp.ne.s32.totalorder %s148, %s149
      %p158 = scmp.eq.s32.totalorder %s21, 0
      %p159 = por %p157, %p158
      %p160 = scmp.ne.s32.totalorder %s148, %s149
      %p161 = scmp.eq.s32.totalorder %s22, 1
      %p162 = por %p160, %p161
      %p164 = scmp.ne.s32.totalorder %s149, %s163
      %p165 = scmp.eq.s32.totalorder %s22, 0
      %p166 = por %p164, %p165
      %s168 = sadd.s32 %s167, 1
      %p171 = scmp.eq.s32.totalorder %s16, 1
      %p172 = scmp.ne.s32.totalorder %s167, %s169
      %p173 = scmp.eq.s32.totalorder %s16, 0
      %p174 = por %p172, %p173
      %p175 = scmp.ne.s32.totalorder %s167, %s169
      %p176 = scmp.eq.s32.totalorder %s21, 1
      %p177 = por %p175, %p176
      %p178 = scmp.ne.s32.totalorder %s169, %s170
      %p179 = scmp.eq.s32.totalorder %s21, 0
      %p180 = por %p178, %p179
      %p181 = scmp.ne.s32.totalorder %s169, %s170
      %p182 = scmp.eq.s32.totalorder %s22, 1
      %p183 = por %p181, %p182
      %p185 = scmp.ne.s32.totalorder %s170, %s184
      %p186 = scmp.eq.s32.totalorder %s22, 0
      %p187 = por %p185, %p186
      %s188 = ssub.s32 %s23, %s35
      %s189 = ssub.s32 %s24, %s31
      %s190 = sor.u32 %s188, %s189
      %p191 = scmp.eq.s32.totalorder %s190, 0
      %s193 = sadd.s32 %s192, 1
      %s194 = scalar_select %p191, %s192, %s193
      %p197 = pneg %p191
      %p198 = scmp.eq.s32.totalorder %s16, 1
      %p199 = por %p197, %p198
      %p200 = scmp.ne.s32.totalorder %s192, %s195
      %p201 = scmp.eq.s32.totalorder %s16, 0
      %p202 = por %p200, %p201
      %p203 = scmp.ne.s32.totalorder %s192, %s195
      %p204 = scmp.eq.s32.totalorder %s21, 1
      %p205 = por %p203, %p204
      %p206 = scmp.ne.s32.totalorder %s195, %s196
      %p207 = scmp.eq.s32.totalorder %s21, 0
      %p208 = por %p206, %p207
      %p209 = scmp.ne.s32.totalorder %s195, %s196
      %p210 = scmp.eq.s32.totalorder %s22, 1
      %p211 = por %p209, %p210
      %p213 = scmp.ne.s32.totalorder %s196, %s212
      %p214 = scmp.eq.s32.totalorder %s22, 0
      %p215 = por %p213, %p214
      %p216 = scmp.le.s32.totalorder 1, %s16
      %p217 = scmp.lt.s32.totalorder %s16, 3
      %p218 = pnand %p216, %p217
      %p219 = pneg %p218
      // Predicated region
      $region9: #{tpu_custom_call.1} parent=5 // pred_check
        _
      $region10: #{tpu_custom_call.1} parent=5 // pred_check_branch
        %221 = sbr.rel (%p218) target = $region12
      $region11: #{tpu_custom_call.1} parent=5 // pred_region
        %s222 = ssub.s32 %s16, 1
        // Predicated region
        $region13: #{tpu_custom_call.1} parent=11 // pred_check
          %p223 = pneg %p75
        $region14: #{tpu_custom_call.1} parent=11 // pred_check_branch
          %225 = sbr.rel (%p223) target = $region16
        $region15: #{tpu_custom_call.1} parent=11 // pred_region
          _
        $region16: #{tpu_custom_call.1} parent=11 // pred_fallthru
          _
        // Predicated region
        $region17: #{tpu_custom_call.1} parent=11 // pred_check
          %p226 = pneg %p96
        $region18: #{tpu_custom_call.1} parent=11 // pred_check_branch
          %228 = sbr.rel (%p226) target = $region20
        $region19: #{tpu_custom_call.1} parent=11 // pred_region
          _
        $region20: #{tpu_custom_call.1} parent=11 // pred_fallthru
          _
        // Predicated region
        $region21: #{tpu_custom_call.1} parent=11 // pred_check
          %p229 = pneg %p117
        $region22: #{tpu_custom_call.1} parent=11 // pred_check_branch
          %231 = sbr.rel (%p229) target = $region24
        $region23: #{tpu_custom_call.1} parent=11 // pred_region
          _
        $region24: #{tpu_custom_call.1} parent=11 // pred_fallthru
          _
        // Predicated region
        $region25: #{tpu_custom_call.1} parent=11 // pred_check
          %p232 = pneg %p138
        $region26: #{tpu_custom_call.1} parent=11 // pred_check_branch
          %234 = sbr.rel (%p232) target = $region28
        $region27: #{tpu_custom_call.1} parent=11 // pred_region
          _
        $region28: #{tpu_custom_call.1} parent=11 // pred_fallthru
          _
        // Predicated region
        $region29: #{tpu_custom_call.1} parent=11 // pred_check
          %p235 = pneg %p159
        $region30: #{tpu_custom_call.1} parent=11 // pred_check_branch
          %237 = sbr.rel (%p235) target = $region32
        $region31: #{tpu_custom_call.1} parent=11 // pred_region
          _
        $region32: #{tpu_custom_call.1} parent=11 // pred_fallthru
          _
        // Predicated region
        $region33: #{tpu_custom_call.1} parent=11 // pred_check
          %p238 = pneg %p180
        $region34: #{tpu_custom_call.1} parent=11 // pred_check_branch
          %240 = sbr.rel (%p238) target = $region36
        $region35: #{tpu_custom_call.1} parent=11 // pred_region
          _
        $region36: #{tpu_custom_call.1} parent=11 // pred_fallthru
          _
      $region12: #{tpu_custom_call.1} parent=5 // pred_fallthru
        _
      %p241 = scmp.lt.s32.totalorder %s16, 2
      // Predicated region
      $region37: #{tpu_custom_call.1} parent=5 // pred_check
        %p242 = pneg %p241
      $region38: #{tpu_custom_call.1} parent=5 // pred_check_branch
        %244 = sbr.rel (%p242) target = $region40
      $region39: #{tpu_custom_call.1} parent=5 // pred_region
        // Predicated region
        $region41: #{tpu_custom_call.1} parent=39 // pred_check
          %p245 = pneg %p48
        $region42: #{tpu_custom_call.1} parent=39 // pred_check_branch
          %247 = sbr.rel (%p245) target = $region44
        $region43: #{tpu_custom_call.1} parent=39 // pred_region
          %p248 = scmp.lt.s32.totalorder %s23, 1
          %s249 = scalar_select %p248, %s23, 1
          %s250 = smul.addr %s249, 8
          %s251 = scalar_lea.vmem %s0, %s250
        $region44: #{tpu_custom_call.1} parent=39 // pred_fallthru
          _
      $region40: #{tpu_custom_call.1} parent=5 // pred_fallthru
        _
      %p252 = scmp.le.s32.totalorder 1, %s16
      %p253 = scmp.lt.s32.totalorder %s16, 3
      %p254 = pnand %p252, %p253
      %p255 = pneg %p254
      // Predicated region
      $region45: #{tpu_custom_call.1} parent=5 // pred_check
        _
      $region46: #{tpu_custom_call.1} parent=5 // pred_check_branch
        %257 = sbr.rel (%p254) target = $region48
      $region47: #{tpu_custom_call.1} parent=5 // pred_region
        %s258 = ssub.s32 %s16, 1
        %p259 = scmp.lt.s32.totalorder %s25, 1
        %s260 = scalar_select %p259, %s25, 1
        %s261 = smul.addr %s260, 8
        %s262 = scalar_lea.vmem %s0, %s261
        %p263 = pneg %p54
        %p264 = pneg %p51
        %p265 = pneg %p75
        %p266 = pneg %p72
        %p267 = pneg %p96
        %p268 = pneg %p93
        %p269 = pneg %p117
        %p270 = pneg %p114
        %p271 = pneg %p138
        %p272 = pneg %p135
        %p273 = pneg %p159
        %p274 = pneg %p156
        %p275 = pneg %p180
        %p276 = pneg %p177
        %p277 = pneg %p208
        %p278 = pneg %p205
        %s279 = sand.u32 %s195, 1
        %s280 = scalar_lea.sflag [#allocation5], %s279
        %s281 = sand.u32 %s195, 1
        %s282 = smul.addr %s281, 8
        %s283 = scalar_lea.vmem [#allocation4], %s282
        %p284 = scmp.lt.s32.totalorder %s25, 1
        %s285 = scalar_select %p284, %s25, 1
        %s286 = smul.addr %s285, 8
        %s287 = scalar_lea.vmem %s0, %s286
        %p288 = scmp.eq.s32.totalorder %s26, 0
        // Predicated region
        $region49: #{tpu_custom_call.1} parent=47 // pred_check
          %p289 = pneg %p288
        $region50: #{tpu_custom_call.1} parent=47 // pred_check_branch
          %291 = sbr.rel (%p289) target = $region52
        $region51: #{tpu_custom_call.1} parent=47 // pred_region
          %v292 = vld [vmem:[%s287] sm:$0xff]
          %v293 = vld [vmem:[%s3] sm:$0xff]
          %v294 = vld [vmem:[%s3 + $0x8] sm:$0xff]
          %v295 = vld [vmem:[%s3 + $0x10] sm:$0xff]
          %v296 = vld [vmem:[%s3 + $0x18] sm:$0xff]
          %v297 = vld [vmem:[%s3 + $0x20] sm:$0xff]
          %v298 = vld [vmem:[%s3 + $0x28] sm:$0xff]
          %v299 = vld [vmem:[%s3 + $0x30] sm:$0xff]
          %v300 = vld [vmem:[%s3 + $0x38] sm:$0xff]
          %v301 = vld [vmem:[%s4] sm:$0x1]
          %v303 = vlaneseq
          %v304 = vshrl.u32 %v303, 7
          %v305 = vsub.s32 0, %v304
          %v306 = vrot.slane %v301, %v305
          %vm308 = vcmask 261120
          %v310 = vsel %vm308, %v292, 0
          %v313 = vsel %vm308, %v293, 0
          %v316 = vsel %vm308, %v294, 0
          %v319 = vsel %vm308, %v295, 0
          %v322 = vsel %vm308, %v296, 0
          %v325 = vsel %vm308, %v297, 0
          %v328 = vsel %vm308, %v298, 0
          %v331 = vsel %vm308, %v299, 0
          %v334 = vsel %vm308, %v300, 0
          %336 = vmatprep.subr.mxu0 0.0
          %337 = vmatpush1.xpose.msra.mxu0 %v313
          %338 = vmatprep.subr.mxu0 0.0
          %339 = vmatpush1.xpose.msra.mxu0 %v316
          %340 = vmatprep.subr.mxu0 0.0
          %341 = vmatpush1.xpose.msra.mxu0 %v319
          %342 = vmatprep.subr.mxu0 0.0
          %343 = vmatpush1.xpose.msra.mxu0 %v322
          %344 = vmatprep.subr.mxu0 0.0
          %345 = vmatpush1.xpose.msra.mxu0 %v325
          %346 = vmatprep.subr.mxu0 0.0
          %347 = vmatpush1.xpose.msra.mxu0 %v328
          %348 = vmatprep.subr.mxu0 0.0
          %349 = vmatpush1.xpose.msra.mxu0 %v331
          %350 = vmatprep.subr.mxu0 0.0
          %351 = vmatpush1.xpose.msra.mxu0 %v334
          %352 = vmatprep.subr.mxu0 0.0
          %353 = vmatpush1.xpose.msra.mxu0 0.0
          %354 = vmatprep.subr.mxu0 0.0
          %355 = vmatpush1.xpose.msra.mxu0 0.0
          %356 = vmatprep.subr.mxu0 0.0
          %357 = vmatpush1.xpose.msra.mxu0 0.0
          %358 = vmatprep.subr.mxu0 0.0
          %359 = vmatpush1.xpose.msra.mxu0 0.0
          %360 = vmatprep.subr.mxu0 0.0
          %361 = vmatpush1.xpose.msra.mxu0 0.0
          %362 = vmatprep.subr.mxu0 0.0
          %363 = vmatpush1.xpose.msra.mxu0 0.0
          %364 = vmatprep.subr.mxu0 0.0
          %365 = vmatpush1.xpose.msra.mxu0 0.0
          %366 = vmatprep.subr.mxu0 0.0
          %367 = vmatpush1.xpose.msra.mxu0 0.0
          %368 = vmatprep.subr.mxu0 0.0
          %369 = vmatpush1.xpose.msra.mxu0 0.0
          %370 = vmatprep.subr.mxu0 0.0
          %371 = vmatpush1.xpose.msra.mxu0 0.0
          %372 = vmatprep.subr.mxu0 0.0
          %373 = vmatpush1.xpose.msra.mxu0 0.0
          %374 = vmatprep.subr.mxu0 0.0
          %375 = vmatpush1.xpose.msra.mxu0 0.0
          %376 = vmatprep.subr.mxu0 0.0
          %377 = vmatpush1.xpose.msra.mxu0 0.0
          %378 = vmatprep.subr.mxu0 0.0
          %379 = vmatpush1.xpose.msra.mxu0 0.0
          %380 = vmatprep.subr.mxu0 0.0
          %381 = vmatpush1.xpose.msra.mxu0 0.0
          %382 = vmatprep.subr.mxu0 0.0
          %383 = vmatpush1.xpose.msra.mxu0 0.0
          %384 = vmatprep.subr.mxu0 0.0
          %385 = vmatpush1.xpose.msra.mxu0 0.0
          %386 = vmatprep.subr.mxu0 0.0
          %387 = vmatpush1.xpose.msra.mxu0 0.0
          %388 = vmatprep.subr.mxu0 0.0
          %389 = vmatpush1.xpose.msra.mxu0 0.0
          %390 = vmatprep.subr.mxu0 0.0
          %391 = vmatpush1.xpose.msra.mxu0 0.0
          %392 = vmatprep.subr.mxu0 0.0
          %393 = vmatpush1.xpose.msra.mxu0 0.0
          %394 = vmatprep.subr.mxu0 0.0
          %395 = vmatpush1.xpose.msra.mxu0 0.0
          %396 = vmatprep.subr.mxu0 0.0
          %397 = vmatpush1.xpose.msra.mxu0 0.0
          %398 = vmatprep.subr.mxu0 0.0
          %399 = vmatpush1.xpose.msra.mxu0 0.0
          %400 = vmatprep.mubr.f32.mxu0 0.0
          %401 = vmatmul.mubr.f32.gmra.mrb[0].mxu0 %v310
          %v402 = vpop.f32.mrb[0].mxu0
          %v403 = vadd.f32 %v306, %v402
          %v404 = vpop.f32.mrb[0].mxu0
          %405 = vdwg.mxu0
          %407 = vrot.lane.b32.xlu0 %v403, 120
          %v408 = vpop.permute.xlu0 %407
          %410 = vrot.lane.b32.xlu0 %v403, 112
          %v411 = vpop.permute.xlu0 %410
          %413 = vrot.lane.b32.xlu0 %v403, 104
          %v414 = vpop.permute.xlu0 %413
          %v416 = vcombine.low %v403, %v411
          %v417 = vcombine.high %v403, %v411
          %v419 = vunpack.c.l.s4 1983009808
          %v420 = vunpack.c.0.s8 %v419
          %v421 = vlaneseq
          %v422 = vshrl.u32 %v421, 7
          %v423 = vsub.s32 %v420, %v422
          %v424 = vrot.slane %v416, %v423
          %v426 = vunpack.c.l.s4 1983009808
          %v427 = vunpack.c.0.s8 %v426
          %v428 = vlaneseq
          %v429 = vshrl.u32 %v428, 7
          %v430 = vsub.s32 %v427, %v429
          %v431 = vrot.slane %v417, %v430
          %v432 = vcombine.low %v408, %v414
          %v433 = vcombine.high %v408, %v414
          %v435 = vunpack.c.l.s4 1983009808
          %v436 = vunpack.c.0.s8 %v435
          %v437 = vlaneseq
          %v438 = vshrl.u32 %v437, 7
          %v439 = vsub.s32 %v436, %v438
          %v440 = vrot.slane %v432, %v439
          %v442 = vunpack.c.l.s4 1983009808
          %v443 = vunpack.c.0.s8 %v442
          %v444 = vlaneseq
          %v445 = vshrl.u32 %v444, 7
          %v446 = vsub.s32 %v443, %v445
          %v447 = vrot.slane %v433, %v446
          %v448 = vcombine.low %v424, %v440
          %v449 = vcombine.high %v424, %v440
          %v451 = vunpack.c.l.s4 1934713408
          %v452 = vunpack.c.0.s8 %v451
          %v453 = vlaneseq
          %v454 = vshrl.u32 %v453, 7
          %v455 = vsub.s32 %v452, %v454
          %v456 = vrot.slane %v448, %v455
          %v458 = vunpack.c.l.s4 1934713408
          %v459 = vunpack.c.0.s8 %v458
          %v460 = vlaneseq
          %v461 = vshrl.u32 %v460, 7
          %v462 = vsub.s32 %v459, %v461
          %v463 = vrot.slane %v449, %v462
          %v464 = vcombine.low %v431, %v447
          %v465 = vcombine.high %v431, %v447
          %v467 = vunpack.c.l.s4 1934713408
          %v468 = vunpack.c.0.s8 %v467
          %v469 = vlaneseq
          %v470 = vshrl.u32 %v469, 7
          %v471 = vsub.s32 %v468, %v470
          %v472 = vrot.slane %v464, %v471
          %v474 = vunpack.c.l.s4 1934713408
          %v475 = vunpack.c.0.s8 %v474
          %v476 = vlaneseq
          %v477 = vshrl.u32 %v476, 7
          %v478 = vsub.s32 %v475, %v477
          %v479 = vrot.slane %v465, %v478
          %v480 = vcombine.high %v456, 0.0
          %v481 = vcombine.high %v463, 0.0
          %v482 = vcombine.high %v472, 0.0
          %v483 = vcombine.high %v479, 0.0
          %v484 = vcombine.low %v456, %v463
          %v486 = vunpack.c.l.s4 1983009808
          %v487 = vunpack.c.0.s8 %v486
          %v488 = vlaneseq
          %v489 = vshrl.u32 %v488, 7
          %v490 = vsub.s32 %v487, %v489
          %v491 = vrot.slane %v484, %v490
          %v492 = vcombine.low %v480, %v481
          %v494 = vunpack.c.l.s4 1983009808
          %v495 = vunpack.c.0.s8 %v494
          %v496 = vlaneseq
          %v497 = vshrl.u32 %v496, 7
          %v498 = vsub.s32 %v495, %v497
          %v499 = vrot.slane %v492, %v498
          %v500 = vcombine.low %v472, %v479
          %v502 = vunpack.c.l.s4 1983009808
          %v503 = vunpack.c.0.s8 %v502
          %v504 = vlaneseq
          %v505 = vshrl.u32 %v504, 7
          %v506 = vsub.s32 %v503, %v505
          %v507 = vrot.slane %v500, %v506
          %v508 = vcombine.low %v482, %v483
          %v510 = vunpack.c.l.s4 1983009808
          %v511 = vunpack.c.0.s8 %v510
          %v512 = vlaneseq
          %v513 = vshrl.u32 %v512, 7
          %v514 = vsub.s32 %v511, %v513
          %v515 = vrot.slane %v508, %v514
          %v516 = vcombine.low %v491, %v499
          %v517 = vcombine.high %v491, %v499
          %v519 = vunpack.c.l.s4 1934713408
          %v520 = vunpack.c.0.s8 %v519
          %v521 = vlaneseq
          %v522 = vshrl.u32 %v521, 7
          %v523 = vsub.s32 %v520, %v522
          %v524 = vrot.slane %v516, %v523
          %v526 = vunpack.c.l.s4 1934713408
          %v527 = vunpack.c.0.s8 %v526
          %v528 = vlaneseq
          %v529 = vshrl.u32 %v528, 7
          %v530 = vsub.s32 %v527, %v529
          %v531 = vrot.slane %v517, %v530
          %v532 = vcombine.low %v507, %v515
          %v533 = vcombine.high %v507, %v515
          %v535 = vunpack.c.l.s4 1934713408
          %v536 = vunpack.c.0.s8 %v535
          %v537 = vlaneseq
          %v538 = vshrl.u32 %v537, 7
          %v539 = vsub.s32 %v536, %v538
          %v540 = vrot.slane %v532, %v539
          %v542 = vunpack.c.l.s4 1934713408
          %v543 = vunpack.c.0.s8 %v542
          %v544 = vlaneseq
          %v545 = vshrl.u32 %v544, 7
          %v546 = vsub.s32 %v543, %v545
          %v547 = vrot.slane %v533, %v546
          %v548 = vcombine.low %v524, %v540
          %v549 = vcombine.high %v524, %v540
          %v550 = vcombine.low %v531, %v547
          %v551 = vcombine.high %v531, %v547
          %vm552 = vcmask 64512
          %553 = vst.msk [vmem:[#allocation2] sm:$0xff] %vm552, %v548
          %554 = vst.msk [vmem:[#allocation2 + $0x8] sm:$0xff] %vm552, %v549
          %555 = vst.msk [vmem:[#allocation2 + $0x10] sm:$0xff] %vm552, %v550
          %556 = vst.msk [vmem:[#allocation2 + $0x18] sm:$0xff] %vm552, %v551
          %557 = vrot.lane.b32.xlu0 %v403, 96
          %v558 = vpop.permute.xlu0 %557
          %559 = vrot.lane.b32.xlu0 %v408, 96
          %v560 = vpop.permute.xlu0 %559
          %561 = vrot.lane.b32.xlu0 %v411, 96
          %v562 = vpop.permute.xlu0 %561
          %563 = vrot.lane.b32.xlu0 %v414, 96
          %v564 = vpop.permute.xlu0 %563
          %v569 = vcombine.low %v558, %v562
          %v570 = vcombine.high %v558, %v562
          %v572 = vunpack.c.l.s4 1983009808
          %v573 = vunpack.c.0.s8 %v572
          %v574 = vlaneseq
          %v575 = vshrl.u32 %v574, 7
          %v576 = vsub.s32 %v573, %v575
          %v577 = vrot.slane %v569, %v576
          %v579 = vunpack.c.l.s4 1983009808
          %v580 = vunpack.c.0.s8 %v579
          %v581 = vlaneseq
          %v582 = vshrl.u32 %v581, 7
          %v583 = vsub.s32 %v580, %v582
          %v584 = vrot.slane %v570, %v583
          %v585 = vcombine.low %v560, %v564
          %v586 = vcombine.high %v560, %v564
          %v588 = vunpack.c.l.s4 1983009808
          %v589 = vunpack.c.0.s8 %v588
          %v590 = vlaneseq
          %v591 = vshrl.u32 %v590, 7
          %v592 = vsub.s32 %v589, %v591
          %v593 = vrot.slane %v585, %v592
          %v595 = vunpack.c.l.s4 1983009808
          %v596 = vunpack.c.0.s8 %v595
          %v597 = vlaneseq
          %v598 = vshrl.u32 %v597, 7
          %v599 = vsub.s32 %v596, %v598
          %v600 = vrot.slane %v586, %v599
          %v601 = vcombine.low %v577, %v593
          %v602 = vcombine.high %v577, %v593
          %v604 = vunpack.c.l.s4 1934713408
          %v605 = vunpack.c.0.s8 %v604
          %v606 = vlaneseq
          %v607 = vshrl.u32 %v606, 7
          %v608 = vsub.s32 %v605, %v607
          %v609 = vrot.slane %v601, %v608
          %v611 = vunpack.c.l.s4 1934713408
          %v612 = vunpack.c.0.s8 %v611
          %v613 = vlaneseq
          %v614 = vshrl.u32 %v613, 7
          %v615 = vsub.s32 %v612, %v614
          %v616 = vrot.slane %v602, %v615
          %v617 = vcombine.low %v584, %v600
          %v618 = vcombine.high %v584, %v600
          %v620 = vunpack.c.l.s4 1934713408
          %v621 = vunpack.c.0.s8 %v620
          %v622 = vlaneseq
          %v623 = vshrl.u32 %v622, 7
          %v624 = vsub.s32 %v621, %v623
          %v625 = vrot.slane %v617, %v624
          %v627 = vunpack.c.l.s4 1934713408
          %v628 = vunpack.c.0.s8 %v627
          %v629 = vlaneseq
          %v630 = vshrl.u32 %v629, 7
          %v631 = vsub.s32 %v628, %v630
          %v632 = vrot.slane %v618, %v631
          %v633 = vcombine.high %v609, 0.0
          %v634 = vcombine.high %v616, 0.0
          %v635 = vcombine.high %v625, 0.0
          %v636 = vcombine.high %v632, 0.0
          %v637 = vcombine.low %v609, %v616
          %v639 = vunpack.c.l.s4 1983009808
          %v640 = vunpack.c.0.s8 %v639
          %v641 = vlaneseq
          %v642 = vshrl.u32 %v641, 7
          %v643 = vsub.s32 %v640, %v642
          %v644 = vrot.slane %v637, %v643
          %v645 = vcombine.low %v633, %v634
          %v647 = vunpack.c.l.s4 1983009808
          %v648 = vunpack.c.0.s8 %v647
          %v649 = vlaneseq
          %v650 = vshrl.u32 %v649, 7
          %v651 = vsub.s32 %v648, %v650
          %v652 = vrot.slane %v645, %v651
          %v653 = vcombine.low %v625, %v632
          %v655 = vunpack.c.l.s4 1983009808
          %v656 = vunpack.c.0.s8 %v655
          %v657 = vlaneseq
          %v658 = vshrl.u32 %v657, 7
          %v659 = vsub.s32 %v656, %v658
          %v660 = vrot.slane %v653, %v659
          %v661 = vcombine.low %v635, %v636
          %v663 = vunpack.c.l.s4 1983009808
          %v664 = vunpack.c.0.s8 %v663
          %v665 = vlaneseq
          %v666 = vshrl.u32 %v665, 7
          %v667 = vsub.s32 %v664, %v666
          %v668 = vrot.slane %v661, %v667
          %v669 = vcombine.low %v644, %v652
          %v670 = vcombine.high %v644, %v652
          %v672 = vunpack.c.l.s4 1934713408
          %v673 = vunpack.c.0.s8 %v672
          %v674 = vlaneseq
          %v675 = vshrl.u32 %v674, 7
          %v676 = vsub.s32 %v673, %v675
          %v677 = vrot.slane %v669, %v676
          %v679 = vunpack.c.l.s4 1934713408
          %v680 = vunpack.c.0.s8 %v679
          %v681 = vlaneseq
          %v682 = vshrl.u32 %v681, 7
          %v683 = vsub.s32 %v680, %v682
          %v684 = vrot.slane %v670, %v683
          %v685 = vcombine.low %v660, %v668
          %v686 = vcombine.high %v660, %v668
          %v688 = vunpack.c.l.s4 1934713408
          %v689 = vunpack.c.0.s8 %v688
          %v690 = vlaneseq
          %v691 = vshrl.u32 %v690, 7
          %v692 = vsub.s32 %v689, %v691
          %v693 = vrot.slane %v685, %v692
          %v695 = vunpack.c.l.s4 1934713408
          %v696 = vunpack.c.0.s8 %v695
          %v697 = vlaneseq
          %v698 = vshrl.u32 %v697, 7
          %v699 = vsub.s32 %v696, %v698
          %v700 = vrot.slane %v686, %v699
          %v701 = vcombine.low %v677, %v693
          %v702 = vcombine.high %v677, %v693
          %v703 = vcombine.low %v684, %v700
          %v704 = vcombine.high %v684, %v700
          %705 = vst.msk [vmem:[#allocation3] sm:$0xff] %vm552, %v701
          %706 = vst.msk [vmem:[#allocation3 + $0x8] sm:$0xff] %vm552, %v702
          %707 = vst.msk [vmem:[#allocation3 + $0x10] sm:$0xff] %vm552, %v703
          %708 = vst.msk [vmem:[#allocation3 + $0x18] sm:$0xff] %vm552, %v704
        $region52: #{tpu_custom_call.1} parent=47 // pred_fallthru
          _
        %v709 = vld [vmem:[%s287] sm:$0xff]
        %v710 = vld [vmem:[%s1] sm:$0xff]
        %v711 = vld [vmem:[%s1 + $0x8] sm:$0xff]
        %v712 = vld [vmem:[%s1 + $0x10] sm:$0xff]
        %v713 = vld [vmem:[%s1 + $0x18] sm:$0xff]
        %v714 = vld [vmem:[%s2] sm:$0x1]
        %v716 = vlaneseq
        %v717 = vshrl.u32 %v716, 7
        %v718 = vsub.s32 0, %v717
        %v719 = vrot.slane %v714, %v718
        %vm721 = vcmask 261120
        %v723 = vsel %vm721, %v709, 0
        %v726 = vsel %vm721, %v710, 0
        %v729 = vsel %vm721, %v711, 0
        %v732 = vsel %vm721, %v712, 0
        %v735 = vsel %vm721, %v713, 0
        %737 = vmatprep.subr.mxu0 0.0
        %738 = vmatpush1.xpose.msra.mxu0 %v726
        %739 = vmatprep.subr.mxu0 0.0
        %740 = vmatpush1.xpose.msra.mxu0 %v729
        %741 = vmatprep.subr.mxu0 0.0
        %742 = vmatpush1.xpose.msra.mxu0 %v732
        %743 = vmatprep.subr.mxu0 0.0
        %744 = vmatpush1.xpose.msra.mxu0 %v735
        %745 = vmatprep.subr.mxu0 0.0
        %746 = vmatpush1.xpose.msra.mxu0 0.0
        %747 = vmatprep.subr.mxu0 0.0
        %748 = vmatpush1.xpose.msra.mxu0 0.0
        %749 = vmatprep.subr.mxu0 0.0
        %750 = vmatpush1.xpose.msra.mxu0 0.0
        %751 = vmatprep.subr.mxu0 0.0
        %752 = vmatpush1.xpose.msra.mxu0 0.0
        %753 = vmatprep.subr.mxu0 0.0
        %754 = vmatpush1.xpose.msra.mxu0 0.0
        %755 = vmatprep.subr.mxu0 0.0
        %756 = vmatpush1.xpose.msra.mxu0 0.0
        %757 = vmatprep.subr.mxu0 0.0
        %758 = vmatpush1.xpose.msra.mxu0 0.0
        %759 = vmatprep.subr.mxu0 0.0
        %760 = vmatpush1.xpose.msra.mxu0 0.0
        %761 = vmatprep.subr.mxu0 0.0
        %762 = vmatpush1.xpose.msra.mxu0 0.0
        %763 = vmatprep.subr.mxu0 0.0
        %764 = vmatpush1.xpose.msra.mxu0 0.0
        %765 = vmatprep.subr.mxu0 0.0
        %766 = vmatpush1.xpose.msra.mxu0 0.0
        %767 = vmatprep.subr.mxu0 0.0
        %768 = vmatpush1.xpose.msra.mxu0 0.0
        %769 = vmatprep.subr.mxu0 0.0
        %770 = vmatpush1.xpose.msra.mxu0 0.0
        %771 = vmatprep.subr.mxu0 0.0
        %772 = vmatpush1.xpose.msra.mxu0 0.0
        %773 = vmatprep.subr.mxu0 0.0
        %774 = vmatpush1.xpose.msra.mxu0 0.0
        %775 = vmatprep.subr.mxu0 0.0
        %776 = vmatpush1.xpose.msra.mxu0 0.0
        %777 = vmatprep.subr.mxu0 0.0
        %778 = vmatpush1.xpose.msra.mxu0 0.0
        %779 = vmatprep.subr.mxu0 0.0
        %780 = vmatpush1.xpose.msra.mxu0 0.0
        %781 = vmatprep.subr.mxu0 0.0
        %782 = vmatpush1.xpose.msra.mxu0 0.0
        %783 = vmatprep.subr.mxu0 0.0
        %784 = vmatpush1.xpose.msra.mxu0 0.0
        %785 = vmatprep.subr.mxu0 0.0
        %786 = vmatpush1.xpose.msra.mxu0 0.0
        %787 = vmatprep.subr.mxu0 0.0
        %788 = vmatpush1.xpose.msra.mxu0 0.0
        %789 = vmatprep.subr.mxu0 0.0
        %790 = vmatpush1.xpose.msra.mxu0 0.0
        %791 = vmatprep.subr.mxu0 0.0
        %792 = vmatpush1.xpose.msra.mxu0 0.0
        %793 = vmatprep.subr.mxu0 0.0
        %794 = vmatpush1.xpose.msra.mxu0 0.0
        %795 = vmatprep.subr.mxu0 0.0
        %796 = vmatpush1.xpose.msra.mxu0 0.0
        %797 = vmatprep.subr.mxu0 0.0
        %798 = vmatpush1.xpose.msra.mxu0 0.0
        %799 = vmatprep.subr.mxu0 0.0
        %800 = vmatpush1.xpose.msra.mxu0 0.0
        %801 = vmatprep.mubr.f32.mxu0 0.0
        %802 = vmatmul.mubr.f32.gmra.mrb[0].mxu0 %v723
        %v803 = vpop.f32.mrb[0].mxu0
        %v804 = vadd.f32 %v719, %v803
        %v805 = vpop.f32.mrb[0].mxu0
        %806 = vdwg.mxu0
        %v807 = vmul.f32 %v804, 0.17677669
        %809 = vrot.lane.b32.xlu0 %v807, 120
        %v810 = vpop.permute.xlu0 %809
        %812 = vrot.lane.b32.xlu0 %v807, 112
        %v813 = vpop.permute.xlu0 %812
        %815 = vrot.lane.b32.xlu0 %v807, 104
        %v816 = vpop.permute.xlu0 %815
        %v818 = vcombine.low %v807, %v813
        %v819 = vcombine.high %v807, %v813
        %v821 = vunpack.c.l.s4 1983009808
        %v822 = vunpack.c.0.s8 %v821
        %v823 = vlaneseq
        %v824 = vshrl.u32 %v823, 7
        %v825 = vsub.s32 %v822, %v824
        %v826 = vrot.slane %v818, %v825
        %v828 = vunpack.c.l.s4 1983009808
        %v829 = vunpack.c.0.s8 %v828
        %v830 = vlaneseq
        %v831 = vshrl.u32 %v830, 7
        %v832 = vsub.s32 %v829, %v831
        %v833 = vrot.slane %v819, %v832
        %v834 = vcombine.low %v810, %v816
        %v835 = vcombine.high %v810, %v816
        %v837 = vunpack.c.l.s4 1983009808
        %v838 = vunpack.c.0.s8 %v837
        %v839 = vlaneseq
        %v840 = vshrl.u32 %v839, 7
        %v841 = vsub.s32 %v838, %v840
        %v842 = vrot.slane %v834, %v841
        %v844 = vunpack.c.l.s4 1983009808
        %v845 = vunpack.c.0.s8 %v844
        %v846 = vlaneseq
        %v847 = vshrl.u32 %v846, 7
        %v848 = vsub.s32 %v845, %v847
        %v849 = vrot.slane %v835, %v848
        %v850 = vcombine.low %v826, %v842
        %v851 = vcombine.high %v826, %v842
        %v853 = vunpack.c.l.s4 1934713408
        %v854 = vunpack.c.0.s8 %v853
        %v855 = vlaneseq
        %v856 = vshrl.u32 %v855, 7
        %v857 = vsub.s32 %v854, %v856
        %v858 = vrot.slane %v850, %v857
        %v860 = vunpack.c.l.s4 1934713408
        %v861 = vunpack.c.0.s8 %v860
        %v862 = vlaneseq
        %v863 = vshrl.u32 %v862, 7
        %v864 = vsub.s32 %v861, %v863
        %v865 = vrot.slane %v851, %v864
        %v866 = vcombine.low %v833, %v849
        %v867 = vcombine.high %v833, %v849
        %v869 = vunpack.c.l.s4 1934713408
        %v870 = vunpack.c.0.s8 %v869
        %v871 = vlaneseq
        %v872 = vshrl.u32 %v871, 7
        %v873 = vsub.s32 %v870, %v872
        %v874 = vrot.slane %v866, %v873
        %v876 = vunpack.c.l.s4 1934713408
        %v877 = vunpack.c.0.s8 %v876
        %v878 = vlaneseq
        %v879 = vshrl.u32 %v878, 7
        %v880 = vsub.s32 %v877, %v879
        %v881 = vrot.slane %v867, %v880
        %v882 = vcombine.high %v858, 0.0
        %v883 = vcombine.high %v865, 0.0
        %v884 = vcombine.high %v874, 0.0
        %v885 = vcombine.high %v881, 0.0
        %v886 = vcombine.low %v858, %v865
        %v888 = vunpack.c.l.s4 1983009808
        %v889 = vunpack.c.0.s8 %v888
        %v890 = vlaneseq
        %v891 = vshrl.u32 %v890, 7
        %v892 = vsub.s32 %v889, %v891
        %v893 = vrot.slane %v886, %v892
        %v894 = vcombine.low %v882, %v883
        %v896 = vunpack.c.l.s4 1983009808
        %v897 = vunpack.c.0.s8 %v896
        %v898 = vlaneseq
        %v899 = vshrl.u32 %v898, 7
        %v900 = vsub.s32 %v897, %v899
        %v901 = vrot.slane %v894, %v900
        %v902 = vcombine.low %v874, %v881
        %v904 = vunpack.c.l.s4 1983009808
        %v905 = vunpack.c.0.s8 %v904
        %v906 = vlaneseq
        %v907 = vshrl.u32 %v906, 7
        %v908 = vsub.s32 %v905, %v907
        %v909 = vrot.slane %v902, %v908
        %v910 = vcombine.low %v884, %v885
        %v912 = vunpack.c.l.s4 1983009808
        %v913 = vunpack.c.0.s8 %v912
        %v914 = vlaneseq
        %v915 = vshrl.u32 %v914, 7
        %v916 = vsub.s32 %v913, %v915
        %v917 = vrot.slane %v910, %v916
        %v918 = vcombine.low %v893, %v901
        %v919 = vcombine.high %v893, %v901
        %v921 = vunpack.c.l.s4 1934713408
        %v922 = vunpack.c.0.s8 %v921
        %v923 = vlaneseq
        %v924 = vshrl.u32 %v923, 7
        %v925 = vsub.s32 %v922, %v924
        %v926 = vrot.slane %v918, %v925
        %v928 = vunpack.c.l.s4 1934713408
        %v929 = vunpack.c.0.s8 %v928
        %v930 = vlaneseq
        %v931 = vshrl.u32 %v930, 7
        %v932 = vsub.s32 %v929, %v931
        %v933 = vrot.slane %v919, %v932
        %v934 = vcombine.low %v909, %v917
        %v935 = vcombine.high %v909, %v917
        %v937 = vunpack.c.l.s4 1934713408
        %v938 = vunpack.c.0.s8 %v937
        %v939 = vlaneseq
        %v940 = vshrl.u32 %v939, 7
        %v941 = vsub.s32 %v938, %v940
        %v942 = vrot.slane %v934, %v941
        %v944 = vunpack.c.l.s4 1934713408
        %v945 = vunpack.c.0.s8 %v944
        %v946 = vlaneseq
        %v947 = vshrl.u32 %v946, 7
        %v948 = vsub.s32 %v945, %v947
        %v949 = vrot.slane %v935, %v948
        %v950 = vcombine.low %v926, %v942
        %v951 = vcombine.high %v926, %v942
        %v952 = vcombine.low %v933, %v949
        %v953 = vcombine.high %v933, %v949
        %v954 = vld [vmem:[#allocation2] sm:$0xff]
        %v955 = vld [vmem:[#allocation2 + $0x8] sm:$0xff]
        %v956 = vld [vmem:[#allocation2 + $0x10] sm:$0xff]
        %v957 = vld [vmem:[#allocation2 + $0x18] sm:$0xff]
        %vm958 = vcmask 64512
        %v960 = vsel %vm958, %v950, 0
        %v963 = vsel %vm958, %v954, 0
        %965 = vmatprep.subr.mxu0 0.0
        %966 = vmatpush1.xpose.msra.mxu0 %v963
        %967 = vmatprep.subr.mxu0 0.0
        %968 = vmatpush1.xpose.msra.mxu0 0.0
        %969 = vmatprep.subr.mxu0 0.0
        %970 = vmatpush1.xpose.msra.mxu0 0.0
        %971 = vmatprep.subr.mxu0 0.0
        %972 = vmatpush1.xpose.msra.mxu0 0.0
        %973 = vmatprep.subr.mxu0 0.0
        %974 = vmatpush1.xpose.msra.mxu0 0.0
        %975 = vmatprep.subr.mxu0 0.0
        %976 = vmatpush1.xpose.msra.mxu0 0.0
        %977 = vmatprep.subr.mxu0 0.0
        %978 = vmatpush1.xpose.msra.mxu0 0.0
        %979 = vmatprep.subr.mxu0 0.0
        %980 = vmatpush1.xpose.msra.mxu0 0.0
        %981 = vmatprep.subr.mxu0 0.0
        %982 = vmatpush1.xpose.msra.mxu0 0.0
        %983 = vmatprep.subr.mxu0 0.0
        %984 = vmatpush1.xpose.msra.mxu0 0.0
        %985 = vmatprep.subr.mxu0 0.0
        %986 = vmatpush1.xpose.msra.mxu0 0.0
        %987 = vmatprep.subr.mxu0 0.0
        %988 = vmatpush1.xpose.msra.mxu0 0.0
        %989 = vmatprep.subr.mxu0 0.0
        %990 = vmatpush1.xpose.msra.mxu0 0.0
        %991 = vmatprep.subr.mxu0 0.0
        %992 = vmatpush1.xpose.msra.mxu0 0.0
        %993 = vmatprep.subr.mxu0 0.0
        %994 = vmatpush1.xpose.msra.mxu0 0.0
        %995 = vmatprep.subr.mxu0 0.0
        %996 = vmatpush1.xpose.msra.mxu0 0.0
        %997 = vmatprep.subr.mxu0 0.0
        %998 = vmatpush1.xpose.msra.mxu0 0.0
        %999 = vmatprep.subr.mxu0 0.0
        %1000 = vmatpush1.xpose.msra.mxu0 0.0
        %1001 = vmatprep.subr.mxu0 0.0
        %1002 = vmatpush1.xpose.msra.mxu0 0.0
        %1003 = vmatprep.subr.mxu0 0.0
        %1004 = vmatpush1.xpose.msra.mxu0 0.0
        %1005 = vmatprep.subr.mxu0 0.0
        %1006 = vmatpush1.xpose.msra.mxu0 0.0
        %1007 = vmatprep.subr.mxu0 0.0
        %1008 = vmatpush1.xpose.msra.mxu0 0.0
        %1009 = vmatprep.subr.mxu0 0.0
        %1010 = vmatpush1.xpose.msra.mxu0 0.0
        %1011 = vmatprep.subr.mxu0 0.0
        %1012 = vmatpush1.xpose.msra.mxu0 0.0
        %1013 = vmatprep.subr.mxu0 0.0
        %1014 = vmatpush1.xpose.msra.mxu0 0.0
        %1015 = vmatprep.subr.mxu0 0.0
        %1016 = vmatpush1.xpose.msra.mxu0 0.0
        %1017 = vmatprep.subr.mxu0 0.0
        %1018 = vmatpush1.xpose.msra.mxu0 0.0
        %1019 = vmatprep.subr.mxu0 0.0
        %1020 = vmatpush1.xpose.msra.mxu0 0.0
        %1021 = vmatprep.subr.mxu0 0.0
        %1022 = vmatpush1.xpose.msra.mxu0 0.0
        %1023 = vmatprep.subr.mxu0 0.0
        %1024 = vmatpush1.xpose.msra.mxu0 0.0
        %1025 = vmatprep.subr.mxu0 0.0
        %1026 = vmatpush1.xpose.msra.mxu0 0.0
        %1027 = vmatprep.subr.mxu0 0.0
        %1028 = vmatpush1.xpose.msra.mxu0 0.0
        %1029 = vmatprep.mubr.f32.mxu0 0.0
        %1030 = vmatmul.mubr.f32.gmra.mrb[0].mxu0 %v960
        %v1031 = vpop.f32.mrb[0].mxu0
        %v1032 = vadd.f32 0.0, %v1031
        %v1033 = vpop.f32.mrb[0].mxu0
        %1034 = vdwg.mxu0
        %v1036 = vsel %vm958, %v951, 0
        %v1039 = vsel %vm958, %v955, 0
        %1041 = vmatprep.subr.mxu0 0.0
        %1042 = vmatpush1.xpose.msra.mxu0 %v1039
        %1043 = vmatprep.subr.mxu0 0.0
        %1044 = vmatpush1.xpose.msra.mxu0 0.0
        %1045 = vmatprep.subr.mxu0 0.0
        %1046 = vmatpush1.xpose.msra.mxu0 0.0
        %1047 = vmatprep.subr.mxu0 0.0
        %1048 = vmatpush1.xpose.msra.mxu0 0.0
        %1049 = vmatprep.subr.mxu0 0.0
        %1050 = vmatpush1.xpose.msra.mxu0 0.0
        %1051 = vmatprep.subr.mxu0 0.0
        %1052 = vmatpush1.xpose.msra.mxu0 0.0
        %1053 = vmatprep.subr.mxu0 0.0
        %1054 = vmatpush1.xpose.msra.mxu0 0.0
        %1055 = vmatprep.subr.mxu0 0.0
        %1056 = vmatpush1.xpose.msra.mxu0 0.0
        %1057 = vmatprep.subr.mxu0 0.0
        %1058 = vmatpush1.xpose.msra.mxu0 0.0
        %1059 = vmatprep.subr.mxu0 0.0
        %1060 = vmatpush1.xpose.msra.mxu0 0.0
        %1061 = vmatprep.subr.mxu0 0.0
        %1062 = vmatpush1.xpose.msra.mxu0 0.0
        %1063 = vmatprep.subr.mxu0 0.0
        %1064 = vmatpush1.xpose.msra.mxu0 0.0
        %1065 = vmatprep.subr.mxu0 0.0
        %1066 = vmatpush1.xpose.msra.mxu0 0.0
        %1067 = vmatprep.subr.mxu0 0.0
        %1068 = vmatpush1.xpose.msra.mxu0 0.0
        %1069 = vmatprep.subr.mxu0 0.0
        %1070 = vmatpush1.xpose.msra.mxu0 0.0
        %1071 = vmatprep.subr.mxu0 0.0
        %1072 = vmatpush1.xpose.msra.mxu0 0.0
        %1073 = vmatprep.subr.mxu0 0.0
        %1074 = vmatpush1.xpose.msra.mxu0 0.0
        %1075 = vmatprep.subr.mxu0 0.0
        %1076 = vmatpush1.xpose.msra.mxu0 0.0
        %1077 = vmatprep.subr.mxu0 0.0
        %1078 = vmatpush1.xpose.msra.mxu0 0.0
        %1079 = vmatprep.subr.mxu0 0.0
        %1080 = vmatpush1.xpose.msra.mxu0 0.0
        %1081 = vmatprep.subr.mxu0 0.0
        %1082 = vmatpush1.xpose.msra.mxu0 0.0
        %1083 = vmatprep.subr.mxu0 0.0
        %1084 = vmatpush1.xpose.msra.mxu0 0.0
        %1085 = vmatprep.subr.mxu0 0.0
        %1086 = vmatpush1.xpose.msra.mxu0 0.0
        %1087 = vmatprep.subr.mxu0 0.0
        %1088 = vmatpush1.xpose.msra.mxu0 0.0
        %1089 = vmatprep.subr.mxu0 0.0
        %1090 = vmatpush1.xpose.msra.mxu0 0.0
        %1091 = vmatprep.subr.mxu0 0.0
        %1092 = vmatpush1.xpose.msra.mxu0 0.0
        %1093 = vmatprep.subr.mxu0 0.0
        %1094 = vmatpush1.xpose.msra.mxu0 0.0
        %1095 = vmatprep.subr.mxu0 0.0
        %1096 = vmatpush1.xpose.msra.mxu0 0.0
        %1097 = vmatprep.subr.mxu0 0.0
        %1098 = vmatpush1.xpose.msra.mxu0 0.0
        %1099 = vmatprep.subr.mxu0 0.0
        %1100 = vmatpush1.xpose.msra.mxu0 0.0
        %1101 = vmatprep.subr.mxu0 0.0
        %1102 = vmatpush1.xpose.msra.mxu0 0.0
        %1103 = vmatprep.subr.mxu0 0.0
        %1104 = vmatpush1.xpose.msra.mxu0 0.0
        %1105 = vmatprep.mubr.f32.mxu0 0.0
        %1106 = vmatmul.mubr.f32.gmra.mrb[0].mxu0 %v1036
        %v1107 = vpop.f32.mrb[0].mxu0
        %v1108 = vadd.f32 0.0, %v1107
        %v1109 = vpop.f32.mrb[0].mxu0
        %1110 = vdwg.mxu0
        %v1112 = vsel %vm958, %v952, 0
        %v1115 = vsel %vm958, %v956, 0
        %1117 = vmatprep.subr.mxu0 0.0
        %1118 = vmatpush1.xpose.msra.mxu0 %v1115
        %1119 = vmatprep.subr.mxu0 0.0
        %1120 = vmatpush1.xpose.msra.mxu0 0.0
        %1121 = vmatprep.subr.mxu0 0.0
        %1122 = vmatpush1.xpose.msra.mxu0 0.0
        %1123 = vmatprep.subr.mxu0 0.0
        %1124 = vmatpush1.xpose.msra.mxu0 0.0
        %1125 = vmatprep.subr.mxu0 0.0
        %1126 = vmatpush1.xpose.msra.mxu0 0.0
        %1127 = vmatprep.subr.mxu0 0.0
        %1128 = vmatpush1.xpose.msra.mxu0 0.0
        %1129 = vmatprep.subr.mxu0 0.0
        %1130 = vmatpush1.xpose.msra.mxu0 0.0
        %1131 = vmatprep.subr.mxu0 0.0
        %1132 = vmatpush1.xpose.msra.mxu0 0.0
        %1133 = vmatprep.subr.mxu0 0.0
        %1134 = vmatpush1.xpose.msra.mxu0 0.0
        %1135 = vmatprep.subr.mxu0 0.0
        %1136 = vmatpush1.xpose.msra.mxu0 0.0
        %1137 = vmatprep.subr.mxu0 0.0
        %1138 = vmatpush1.xpose.msra.mxu0 0.0
        %1139 = vmatprep.subr.mxu0 0.0
        %1140 = vmatpush1.xpose.msra.mxu0 0.0
        %1141 = vmatprep.subr.mxu0 0.0
        %1142 = vmatpush1.xpose.msra.mxu0 0.0
        %1143 = vmatprep.subr.mxu0 0.0
        %1144 = vmatpush1.xpose.msra.mxu0 0.0
        %1145 = vmatprep.subr.mxu0 0.0
        %1146 = vmatpush1.xpose.msra.mxu0 0.0
        %1147 = vmatprep.subr.mxu0 0.0
        %1148 = vmatpush1.xpose.msra.mxu0 0.0
        %1149 = vmatprep.subr.mxu0 0.0
        %1150 = vmatpush1.xpose.msra.mxu0 0.0
        %1151 = vmatprep.subr.mxu0 0.0
        %1152 = vmatpush1.xpose.msra.mxu0 0.0
        %1153 = vmatprep.subr.mxu0 0.0
        %1154 = vmatpush1.xpose.msra.mxu0 0.0
        %1155 = vmatprep.subr.mxu0 0.0
        %1156 = vmatpush1.xpose.msra.mxu0 0.0
        %1157 = vmatprep.subr.mxu0 0.0
        %1158 = vmatpush1.xpose.msra.mxu0 0.0
        %1159 = vmatprep.subr.mxu0 0.0
        %1160 = vmatpush1.xpose.msra.mxu0 0.0
        %1161 = vmatprep.subr.mxu0 0.0
        %1162 = vmatpush1.xpose.msra.mxu0 0.0
        %1163 = vmatprep.subr.mxu0 0.0
        %1164 = vmatpush1.xpose.msra.mxu0 0.0
        %1165 = vmatprep.subr.mxu0 0.0
        %1166 = vmatpush1.xpose.msra.mxu0 0.0
        %1167 = vmatprep.subr.mxu0 0.0
        %1168 = vmatpush1.xpose.msra.mxu0 0.0
        %1169 = vmatprep.subr.mxu0 0.0
        %1170 = vmatpush1.xpose.msra.mxu0 0.0
        %1171 = vmatprep.subr.mxu0 0.0
        %1172 = vmatpush1.xpose.msra.mxu0 0.0
        %1173 = vmatprep.subr.mxu0 0.0
        %1174 = vmatpush1.xpose.msra.mxu0 0.0
        %1175 = vmatprep.subr.mxu0 0.0
        %1176 = vmatpush1.xpose.msra.mxu0 0.0
        %1177 = vmatprep.subr.mxu0 0.0
        %1178 = vmatpush1.xpose.msra.mxu0 0.0
        %1179 = vmatprep.subr.mxu0 0.0
        %1180 = vmatpush1.xpose.msra.mxu0 0.0
        %1181 = vmatprep.mubr.f32.mxu0 0.0
        %1182 = vmatmul.mubr.f32.gmra.mrb[0].mxu0 %v1112
        %v1183 = vpop.f32.mrb[0].mxu0
        %v1184 = vadd.f32 0.0, %v1183
        %v1185 = vpop.f32.mrb[0].mxu0
        %1186 = vdwg.mxu0
        %v1188 = vsel %vm958, %v953, 0
        %v1191 = vsel %vm958, %v957, 0
        %1193 = vmatprep.subr.mxu0 0.0
        %1194 = vmatpush1.xpose.msra.mxu0 %v1191
        %1195 = vmatprep.subr.mxu0 0.0
        %1196 = vmatpush1.xpose.msra.mxu0 0.0
        %1197 = vmatprep.subr.mxu0 0.0
        %1198 = vmatpush1.xpose.msra.mxu0 0.0
        %1199 = vmatprep.subr.mxu0 0.0
        %1200 = vmatpush1.xpose.msra.mxu0 0.0
        %1201 = vmatprep.subr.mxu0 0.0
        %1202 = vmatpush1.xpose.msra.mxu0 0.0
        %1203 = vmatprep.subr.mxu0 0.0
        %1204 = vmatpush1.xpose.msra.mxu0 0.0
        %1205 = vmatprep.subr.mxu0 0.0
        %1206 = vmatpush1.xpose.msra.mxu0 0.0
        %1207 = vmatprep.subr.mxu0 0.0
        %1208 = vmatpush1.xpose.msra.mxu0 0.0
        %1209 = vmatprep.subr.mxu0 0.0
        %1210 = vmatpush1.xpose.msra.mxu0 0.0
        %1211 = vmatprep.subr.mxu0 0.0
        %1212 = vmatpush1.xpose.msra.mxu0 0.0
        %1213 = vmatprep.subr.mxu0 0.0
        %1214 = vmatpush1.xpose.msra.mxu0 0.0
        %1215 = vmatprep.subr.mxu0 0.0
        %1216 = vmatpush1.xpose.msra.mxu0 0.0
        %1217 = vmatprep.subr.mxu0 0.0
        %1218 = vmatpush1.xpose.msra.mxu0 0.0
        %1219 = vmatprep.subr.mxu0 0.0
        %1220 = vmatpush1.xpose.msra.mxu0 0.0
        %1221 = vmatprep.subr.mxu0 0.0
        %1222 = vmatpush1.xpose.msra.mxu0 0.0
        %1223 = vmatprep.subr.mxu0 0.0
        %1224 = vmatpush1.xpose.msra.mxu0 0.0
        %1225 = vmatprep.subr.mxu0 0.0
        %1226 = vmatpush1.xpose.msra.mxu0 0.0
        %1227 = vmatprep.subr.mxu0 0.0
        %1228 = vmatpush1.xpose.msra.mxu0 0.0
        %1229 = vmatprep.subr.mxu0 0.0
        %1230 = vmatpush1.xpose.msra.mxu0 0.0
        %1231 = vmatprep.subr.mxu0 0.0
        %1232 = vmatpush1.xpose.msra.mxu0 0.0
        %1233 = vmatprep.subr.mxu0 0.0
        %1234 = vmatpush1.xpose.msra.mxu0 0.0
        %1235 = vmatprep.subr.mxu0 0.0
        %1236 = vmatpush1.xpose.msra.mxu0 0.0
        %1237 = vmatprep.subr.mxu0 0.0
        %1238 = vmatpush1.xpose.msra.mxu0 0.0
        %1239 = vmatprep.subr.mxu0 0.0
        %1240 = vmatpush1.xpose.msra.mxu0 0.0
        %1241 = vmatprep.subr.mxu0 0.0
        %1242 = vmatpush1.xpose.msra.mxu0 0.0
        %1243 = vmatprep.subr.mxu0 0.0
        %1244 = vmatpush1.xpose.msra.mxu0 0.0
        %1245 = vmatprep.subr.mxu0 0.0
        %1246 = vmatpush1.xpose.msra.mxu0 0.0
        %1247 = vmatprep.subr.mxu0 0.0
        %1248 = vmatpush1.xpose.msra.mxu0 0.0
        %1249 = vmatprep.subr.mxu0 0.0
        %1250 = vmatpush1.xpose.msra.mxu0 0.0
        %1251 = vmatprep.subr.mxu0 0.0
        %1252 = vmatpush1.xpose.msra.mxu0 0.0
        %1253 = vmatprep.subr.mxu0 0.0
        %1254 = vmatpush1.xpose.msra.mxu0 0.0
        %1255 = vmatprep.subr.mxu0 0.0
        %1256 = vmatpush1.xpose.msra.mxu0 0.0
        %1257 = vmatprep.mubr.f32.mxu0 0.0
        %1258 = vmatmul.mubr.f32.gmra.mrb[0].mxu0 %v1188
        %v1259 = vpop.f32.mrb[0].mxu0
        %v1260 = vadd.f32 0.0, %v1259
        %v1261 = vpop.f32.mrb[0].mxu0
        %1262 = vdwg.mxu0
        %v1263 = vsel %vm958, %v1032, -inf
        %1264 = vmax.xlane.f32.xlu0 %v1263
        %v1265 = vpop.xlane.xlu0 %1264
        %v1266 = vsel %vm958, %v1108, -inf
        %1267 = vmax.xlane.f32.xlu0 %v1266
        %v1268 = vpop.xlane.xlu0 %1267
        %v1269 = vsel %vm958, %v1184, -inf
        %1270 = vmax.xlane.f32.xlu0 %v1269
        %v1271 = vpop.xlane.xlu0 %1270
        %v1272 = vsel %vm958, %v1260, -inf
        %1273 = vmax.xlane.f32.xlu0 %v1272
        %v1274 = vpop.xlane.xlu0 %1273
        %v1275 = vsub.f32 %v1032, %v1265
        %v1276 = vsub.f32 %v1108, %v1268
        %v1277 = vsub.f32 %v1184, %v1271
        %v1278 = vsub.f32 %v1260, %v1274
        %v1279 = vmul.f32 %v1275, 1.442695
        %v1280 = vpow.pop %v1279
        %v1281 = vmul.f32 %v1276, 1.442695
        %v1282 = vpow.pop %v1281
        %v1283 = vmul.f32 %v1277, 1.442695
        %v1284 = vpow.pop %v1283
        %v1285 = vmul.f32 %v1278, 1.442695
        %v1286 = vpow.pop %v1285
        %v1287 = vsel %vm958, %v1280, 0.0
        %1288 = vadd.xlane.f32.xlu0 %v1287
        %v1289 = vpop.xlane.xlu0 %1288
        %v1290 = vsel %vm958, %v1282, 0.0
        %1291 = vadd.xlane.f32.xlu0 %v1290
        %v1292 = vpop.xlane.xlu0 %1291
        %v1293 = vsel %vm958, %v1284, 0.0
        %1294 = vadd.xlane.f32.xlu0 %v1293
        %v1295 = vpop.xlane.xlu0 %1294
        %v1296 = vsel %vm958, %v1286, 0.0
        %1297 = vadd.xlane.f32.xlu0 %v1296
        %v1298 = vpop.xlane.xlu0 %1297
        %v1299 = vld [vmem:[#allocation3] sm:$0xff]
        %v1300 = vld [vmem:[#allocation3 + $0x8] sm:$0xff]
        %v1301 = vld [vmem:[#allocation3 + $0x10] sm:$0xff]
        %v1302 = vld [vmem:[#allocation3 + $0x18] sm:$0xff]
        %v1304 = vsel %vm958, %v1280, 0
        %1306 = vmatprep.subr.mxu0 0.0
        %1307 = vmatpush1.msra.mxu0 %v1299
        %1308 = vmatprep.subr.mxu0 0.0
        %1309 = vmatpush1.msra.mxu0 0.0
        %1310 = vmatprep.subr.mxu0 0.0
        %1311 = vmatpush1.msra.mxu0 0.0
        %1312 = vmatprep.subr.mxu0 0.0
        %1313 = vmatpush1.msra.mxu0 0.0
        %1314 = vmatprep.subr.mxu0 0.0
        %1315 = vmatpush1.msra.mxu0 0.0
        %1316 = vmatprep.subr.mxu0 0.0
        %1317 = vmatpush1.msra.mxu0 0.0
        %1318 = vmatprep.subr.mxu0 0.0
        %1319 = vmatpush1.msra.mxu0 0.0
        %1320 = vmatprep.subr.mxu0 0.0
        %1321 = vmatpush1.msra.mxu0 0.0
        %1322 = vmatprep.subr.mxu0 0.0
        %1323 = vmatpush1.msra.mxu0 0.0
        %1324 = vmatprep.subr.mxu0 0.0
        %1325 = vmatpush1.msra.mxu0 0.0
        %1326 = vmatprep.subr.mxu0 0.0
        %1327 = vmatpush1.msra.mxu0 0.0
        %1328 = vmatprep.subr.mxu0 0.0
        %1329 = vmatpush1.msra.mxu0 0.0
        %1330 = vmatprep.subr.mxu0 0.0
        %1331 = vmatpush1.msra.mxu0 0.0
        %1332 = vmatprep.subr.mxu0 0.0
        %1333 = vmatpush1.msra.mxu0 0.0
        %1334 = vmatprep.subr.mxu0 0.0
        %1335 = vmatpush1.msra.mxu0 0.0
        %1336 = vmatprep.subr.mxu0 0.0
        %1337 = vmatpush1.msra.mxu0 0.0
        %1338 = vmatprep.subr.mxu0 0.0
        %1339 = vmatpush1.msra.mxu0 0.0
        %1340 = vmatprep.subr.mxu0 0.0
        %1341 = vmatpush1.msra.mxu0 0.0
        %1342 = vmatprep.subr.mxu0 0.0
        %1343 = vmatpush1.msra.mxu0 0.0
        %1344 = vmatprep.subr.mxu0 0.0
        %1345 = vmatpush1.msra.mxu0 0.0
        %1346 = vmatprep.subr.mxu0 0.0
        %1347 = vmatpush1.msra.mxu0 0.0
        %1348 = vmatprep.subr.mxu0 0.0
        %1349 = vmatpush1.msra.mxu0 0.0
        %1350 = vmatprep.subr.mxu0 0.0
        %1351 = vmatpush1.msra.mxu0 0.0
        %1352 = vmatprep.subr.mxu0 0.0
        %1353 = vmatpush1.msra.mxu0 0.0
        %1354 = vmatprep.subr.mxu0 0.0
        %1355 = vmatpush1.msra.mxu0 0.0
        %1356 = vmatprep.subr.mxu0 0.0
        %1357 = vmatpush1.msra.mxu0 0.0
        %1358 = vmatprep.subr.mxu0 0.0
        %1359 = vmatpush1.msra.mxu0 0.0
        %1360 = vmatprep.subr.mxu0 0.0
        %1361 = vmatpush1.msra.mxu0 0.0
        %1362 = vmatprep.subr.mxu0 0.0
        %1363 = vmatpush1.msra.mxu0 0.0
        %1364 = vmatprep.subr.mxu0 0.0
        %1365 = vmatpush1.msra.mxu0 0.0
        %1366 = vmatprep.subr.mxu0 0.0
        %1367 = vmatpush1.msra.mxu0 0.0
        %1368 = vmatprep.subr.mxu0 0.0
        %1369 = vmatpush1.msra.mxu0 0.0
        %1370 = vmatprep.mubr.f32.mxu0 0.0
        %1371 = vmatmul.mubr.f32.gmra.mrb[0].mxu0 %v1304
        %v1372 = vpop.f32.mrb[0].mxu0
        %v1373 = vadd.f32 0.0, %v1372
        %v1374 = vpop.f32.mrb[0].mxu0
        %1375 = vdwg.mxu0
        %v1377 = vsel %vm958, %v1282, 0
        %1379 = vmatprep.subr.mxu0 0.0
        %1380 = vmatpush1.msra.mxu0 %v1300
        %1381 = vmatprep.subr.mxu0 0.0
        %1382 = vmatpush1.msra.mxu0 0.0
        %1383 = vmatprep.subr.mxu0 0.0
        %1384 = vmatpush1.msra.mxu0 0.0
        %1385 = vmatprep.subr.mxu0 0.0
        %1386 = vmatpush1.msra.mxu0 0.0
        %1387 = vmatprep.subr.mxu0 0.0
        %1388 = vmatpush1.msra.mxu0 0.0
        %1389 = vmatprep.subr.mxu0 0.0
        %1390 = vmatpush1.msra.mxu0 0.0
        %1391 = vmatprep.subr.mxu0 0.0
        %1392 = vmatpush1.msra.mxu0 0.0
        %1393 = vmatprep.subr.mxu0 0.0
        %1394 = vmatpush1.msra.mxu0 0.0
        %1395 = vmatprep.subr.mxu0 0.0
        %1396 = vmatpush1.msra.mxu0 0.0
        %1397 = vmatprep.subr.mxu0 0.0
        %1398 = vmatpush1.msra.mxu0 0.0
        %1399 = vmatprep.subr.mxu0 0.0
        %1400 = vmatpush1.msra.mxu0 0.0
        %1401 = vmatprep.subr.mxu0 0.0
        %1402 = vmatpush1.msra.mxu0 0.0
        %1403 = vmatprep.subr.mxu0 0.0
        %1404 = vmatpush1.msra.mxu0 0.0
        %1405 = vmatprep.subr.mxu0 0.0
        %1406 = vmatpush1.msra.mxu0 0.0
        %1407 = vmatprep.subr.mxu0 0.0
        %1408 = vmatpush1.msra.mxu0 0.0
        %1409 = vmatprep.subr.mxu0 0.0
        %1410 = vmatpush1.msra.mxu0 0.0
        %1411 = vmatprep.subr.mxu0 0.0
        %1412 = vmatpush1.msra.mxu0 0.0
        %1413 = vmatprep.subr.mxu0 0.0
        %1414 = vmatpush1.msra.mxu0 0.0
        %1415 = vmatprep.subr.mxu0 0.0
        %1416 = vmatpush1.msra.mxu0 0.0
        %1417 = vmatprep.subr.mxu0 0.0
        %1418 = vmatpush1.msra.mxu0 0.0
        %1419 = vmatprep.subr.mxu0 0.0
        %1420 = vmatpush1.msra.mxu0 0.0
        %1421 = vmatprep.subr.mxu0 0.0
        %1422 = vmatpush1.msra.mxu0 0.0
        %1423 = vmatprep.subr.mxu0 0.0
        %1424 = vmatpush1.msra.mxu0 0.0
        %1425 = vmatprep.subr.mxu0 0.0
        %1426 = vmatpush1.msra.mxu0 0.0
        %1427 = vmatprep.subr.mxu0 0.0
        %1428 = vmatpush1.msra.mxu0 0.0
        %1429 = vmatprep.subr.mxu0 0.0
        %1430 = vmatpush1.msra.mxu0 0.0
        %1431 = vmatprep.subr.mxu0 0.0
        %1432 = vmatpush1.msra.mxu0 0.0
        %1433 = vmatprep.subr.mxu0 0.0
        %1434 = vmatpush1.msra.mxu0 0.0
        %1435 = vmatprep.subr.mxu0 0.0
        %1436 = vmatpush1.msra.mxu0 0.0
        %1437 = vmatprep.subr.mxu0 0.0
        %1438 = vmatpush1.msra.mxu0 0.0
        %1439 = vmatprep.subr.mxu0 0.0
        %1440 = vmatpush1.msra.mxu0 0.0
        %1441 = vmatprep.subr.mxu0 0.0
        %1442 = vmatpush1.msra.mxu0 0.0
        %1443 = vmatprep.mubr.f32.mxu0 0.0
        %1444 = vmatmul.mubr.f32.gmra.mrb[0].mxu0 %v1377
        %v1445 = vpop.f32.mrb[0].mxu0
        %v1446 = vadd.f32 0.0, %v1445
        %v1447 = vpop.f32.mrb[0].mxu0
        %1448 = vdwg.mxu0
        %v1450 = vsel %vm958, %v1284, 0
        %1452 = vmatprep.subr.mxu0 0.0
        %1453 = vmatpush1.msra.mxu0 %v1301
        %1454 = vmatprep.subr.mxu0 0.0
        %1455 = vmatpush1.msra.mxu0 0.0
        %1456 = vmatprep.subr.mxu0 0.0
        %1457 = vmatpush1.msra.mxu0 0.0
        %1458 = vmatprep.subr.mxu0 0.0
        %1459 = vmatpush1.msra.mxu0 0.0
        %1460 = vmatprep.subr.mxu0 0.0
        %1461 = vmatpush1.msra.mxu0 0.0
        %1462 = vmatprep.subr.mxu0 0.0
        %1463 = vmatpush1.msra.mxu0 0.0
        %1464 = vmatprep.subr.mxu0 0.0
        %1465 = vmatpush1.msra.mxu0 0.0
        %1466 = vmatprep.subr.mxu0 0.0
        %1467 = vmatpush1.msra.mxu0 0.0
        %1468 = vmatprep.subr.mxu0 0.0
        %1469 = vmatpush1.msra.mxu0 0.0
        %1470 = vmatprep.subr.mxu0 0.0
        %1471 = vmatpush1.msra.mxu0 0.0
        %1472 = vmatprep.subr.mxu0 0.0
        %1473 = vmatpush1.msra.mxu0 0.0
        %1474 = vmatprep.subr.mxu0 0.0
        %1475 = vmatpush1.msra.mxu0 0.0
        %1476 = vmatprep.subr.mxu0 0.0
        %1477 = vmatpush1.msra.mxu0 0.0
        %1478 = vmatprep.subr.mxu0 0.0
        %1479 = vmatpush1.msra.mxu0 0.0
        %1480 = vmatprep.subr.mxu0 0.0
        %1481 = vmatpush1.msra.mxu0 0.0
        %1482 = vmatprep.subr.mxu0 0.0
        %1483 = vmatpush1.msra.mxu0 0.0
        %1484 = vmatprep.subr.mxu0 0.0
        %1485 = vmatpush1.msra.mxu0 0.0
        %1486 = vmatprep.subr.mxu0 0.0
        %1487 = vmatpush1.msra.mxu0 0.0
        %1488 = vmatprep.subr.mxu0 0.0
        %1489 = vmatpush1.msra.mxu0 0.0
        %1490 = vmatprep.subr.mxu0 0.0
        %1491 = vmatpush1.msra.mxu0 0.0
        %1492 = vmatprep.subr.mxu0 0.0
        %1493 = vmatpush1.msra.mxu0 0.0
        %1494 = vmatprep.subr.mxu0 0.0
        %1495 = vmatpush1.msra.mxu0 0.0
        %1496 = vmatprep.subr.mxu0 0.0
        %1497 = vmatpush1.msra.mxu0 0.0
        %1498 = vmatprep.subr.mxu0 0.0
        %1499 = vmatpush1.msra.mxu0 0.0
        %1500 = vmatprep.subr.mxu0 0.0
        %1501 = vmatpush1.msra.mxu0 0.0
        %1502 = vmatprep.subr.mxu0 0.0
        %1503 = vmatpush1.msra.mxu0 0.0
        %1504 = vmatprep.subr.mxu0 0.0
        %1505 = vmatpush1.msra.mxu0 0.0
        %1506 = vmatprep.subr.mxu0 0.0
        %1507 = vmatpush1.msra.mxu0 0.0
        %1508 = vmatprep.subr.mxu0 0.0
        %1509 = vmatpush1.msra.mxu0 0.0
        %1510 = vmatprep.subr.mxu0 0.0
        %1511 = vmatpush1.msra.mxu0 0.0
        %1512 = vmatprep.subr.mxu0 0.0
        %1513 = vmatpush1.msra.mxu0 0.0
        %1514 = vmatprep.subr.mxu0 0.0
        %1515 = vmatpush1.msra.mxu0 0.0
        %1516 = vmatprep.mubr.f32.mxu0 0.0
        %1517 = vmatmul.mubr.f32.gmra.mrb[0].mxu0 %v1450
        %v1518 = vpop.f32.mrb[0].mxu0
        %v1519 = vadd.f32 0.0, %v1518
        %v1520 = vpop.f32.mrb[0].mxu0
        %1521 = vdwg.mxu0
        %v1523 = vsel %vm958, %v1286, 0
        %1525 = vmatprep.subr.mxu0 0.0
        %1526 = vmatpush1.msra.mxu0 %v1302
        %1527 = vmatprep.subr.mxu0 0.0
        %1528 = vmatpush1.msra.mxu0 0.0
        %1529 = vmatprep.subr.mxu0 0.0
        %1530 = vmatpush1.msra.mxu0 0.0
        %1531 = vmatprep.subr.mxu0 0.0
        %1532 = vmatpush1.msra.mxu0 0.0
        %1533 = vmatprep.subr.mxu0 0.0
        %1534 = vmatpush1.msra.mxu0 0.0
        %1535 = vmatprep.subr.mxu0 0.0
        %1536 = vmatpush1.msra.mxu0 0.0
        %1537 = vmatprep.subr.mxu0 0.0
        %1538 = vmatpush1.msra.mxu0 0.0
        %1539 = vmatprep.subr.mxu0 0.0
        %1540 = vmatpush1.msra.mxu0 0.0
        %1541 = vmatprep.subr.mxu0 0.0
        %1542 = vmatpush1.msra.mxu0 0.0
        %1543 = vmatprep.subr.mxu0 0.0
        %1544 = vmatpush1.msra.mxu0 0.0
        %1545 = vmatprep.subr.mxu0 0.0
        %1546 = vmatpush1.msra.mxu0 0.0
        %1547 = vmatprep.subr.mxu0 0.0
        %1548 = vmatpush1.msra.mxu0 0.0
        %1549 = vmatprep.subr.mxu0 0.0
        %1550 = vmatpush1.msra.mxu0 0.0
        %1551 = vmatprep.subr.mxu0 0.0
        %1552 = vmatpush1.msra.mxu0 0.0
        %1553 = vmatprep.subr.mxu0 0.0
        %1554 = vmatpush1.msra.mxu0 0.0
        %1555 = vmatprep.subr.mxu0 0.0
        %1556 = vmatpush1.msra.mxu0 0.0
        %1557 = vmatprep.subr.mxu0 0.0
        %1558 = vmatpush1.msra.mxu0 0.0
        %1559 = vmatprep.subr.mxu0 0.0
        %1560 = vmatpush1.msra.mxu0 0.0
        %1561 = vmatprep.subr.mxu0 0.0
        %1562 = vmatpush1.msra.mxu0 0.0
        %1563 = vmatprep.subr.mxu0 0.0
        %1564 = vmatpush1.msra.mxu0 0.0
        %1565 = vmatprep.subr.mxu0 0.0
        %1566 = vmatpush1.msra.mxu0 0.0
        %1567 = vmatprep.subr.mxu0 0.0
        %1568 = vmatpush1.msra.mxu0 0.0
        %1569 = vmatprep.subr.mxu0 0.0
        %1570 = vmatpush1.msra.mxu0 0.0
        %1571 = vmatprep.subr.mxu0 0.0
        %1572 = vmatpush1.msra.mxu0 0.0
        %1573 = vmatprep.subr.mxu0 0.0
        %1574 = vmatpush1.msra.mxu0 0.0
        %1575 = vmatprep.subr.mxu0 0.0
        %1576 = vmatpush1.msra.mxu0 0.0
        %1577 = vmatprep.subr.mxu0 0.0
        %1578 = vmatpush1.msra.mxu0 0.0
        %1579 = vmatprep.subr.mxu0 0.0
        %1580 = vmatpush1.msra.mxu0 0.0
        %1581 = vmatprep.subr.mxu0 0.0
        %1582 = vmatpush1.msra.mxu0 0.0
        %1583 = vmatprep.subr.mxu0 0.0
        %1584 = vmatpush1.msra.mxu0 0.0
        %1585 = vmatprep.subr.mxu0 0.0
        %1586 = vmatpush1.msra.mxu0 0.0
        %1587 = vmatprep.subr.mxu0 0.0
        %1588 = vmatpush1.msra.mxu0 0.0
        %1589 = vmatprep.mubr.f32.mxu0 0.0
        %1590 = vmatmul.mubr.f32.gmra.mrb[0].mxu0 %v1523
        %v1591 = vpop.f32.mrb[0].mxu0
        %v1592 = vadd.f32 0.0, %v1591
        %v1593 = vpop.f32.mrb[0].mxu0
        %1594 = vdwg.mxu0
        %v1595 = vrcp.pop %v1289
        %v1596 = vrcp.pop %v1292
        %v1597 = vrcp.pop %v1295
        %v1598 = vrcp.pop %v1298
        %v1599 = vmul.f32 %v1373, %v1595
        %v1600 = vmul.f32 %v1446, %v1596
        %v1601 = vmul.f32 %v1519, %v1597
        %v1602 = vmul.f32 %v1592, %v1598
        %v1603 = vcombine.low %v1599, %v1601
        %v1604 = vcombine.high %v1599, %v1601
        %v1606 = vunpack.c.l.s4 1983009808
        %v1607 = vunpack.c.0.s8 %v1606
        %v1608 = vlaneseq
        %v1609 = vshrl.u32 %v1608, 7
        %v1610 = vsub.s32 %v1607, %v1609
        %v1611 = vrot.slane %v1603, %v1610
        %v1613 = vunpack.c.l.s4 1983009808
        %v1614 = vunpack.c.0.s8 %v1613
        %v1615 = vlaneseq
        %v1616 = vshrl.u32 %v1615, 7
        %v1617 = vsub.s32 %v1614, %v1616
        %v1618 = vrot.slane %v1604, %v1617
        %v1619 = vcombine.low %v1600, %v1602
        %v1620 = vcombine.high %v1600, %v1602
        %v1622 = vunpack.c.l.s4 1983009808
        %v1623 = vunpack.c.0.s8 %v1622
        %v1624 = vlaneseq
        %v1625 = vshrl.u32 %v1624, 7
        %v1626 = vsub.s32 %v1623, %v1625
        %v1627 = vrot.slane %v1619, %v1626
        %v1629 = vunpack.c.l.s4 1983009808
        %v1630 = vunpack.c.0.s8 %v1629
        %v1631 = vlaneseq
        %v1632 = vshrl.u32 %v1631, 7
        %v1633 = vsub.s32 %v1630, %v1632
        %v1634 = vrot.slane %v1620, %v1633
        %v1635 = vcombine.low %v1611, %v1627
        %v1636 = vcombine.high %v1611, %v1627
        %v1638 = vunpack.c.l.s4 1934713408
        %v1639 = vunpack.c.0.s8 %v1638
        %v1640 = vlaneseq
        %v1641 = vshrl.u32 %v1640, 7
        %v1642 = vsub.s32 %v1639, %v1641
        %v1643 = vrot.slane %v1635, %v1642
        %v1645 = vunpack.c.l.s4 1934713408
        %v1646 = vunpack.c.0.s8 %v1645
        %v1647 = vlaneseq
        %v1648 = vshrl.u32 %v1647, 7
        %v1649 = vsub.s32 %v1646, %v1648
        %v1650 = vrot.slane %v1636, %v1649
        %v1651 = vcombine.low %v1618, %v1634
        %v1652 = vcombine.high %v1618, %v1634
        %v1654 = vunpack.c.l.s4 1934713408
        %v1655 = vunpack.c.0.s8 %v1654
        %v1656 = vlaneseq
        %v1657 = vshrl.u32 %v1656, 7
        %v1658 = vsub.s32 %v1655, %v1657
        %v1659 = vrot.slane %v1651, %v1658
        %v1661 = vunpack.c.l.s4 1934713408
        %v1662 = vunpack.c.0.s8 %v1661
        %v1663 = vlaneseq
        %v1664 = vshrl.u32 %v1663, 7
        %v1665 = vsub.s32 %v1662, %v1664
        %v1666 = vrot.slane %v1652, %v1665
        %v1667 = vcombine.high %v1643, 0.0
        %v1668 = vcombine.high %v1650, 0.0
        %v1669 = vcombine.high %v1659, 0.0
        %v1670 = vcombine.high %v1666, 0.0
        %v1671 = vcombine.low %v1643, %v1650
        %v1673 = vunpack.c.l.s4 1983009808
        %v1674 = vunpack.c.0.s8 %v1673
        %v1675 = vlaneseq
        %v1676 = vshrl.u32 %v1675, 7
        %v1677 = vsub.s32 %v1674, %v1676
        %v1678 = vrot.slane %v1671, %v1677
        %v1679 = vcombine.low %v1667, %v1668
        %v1681 = vunpack.c.l.s4 1983009808
        %v1682 = vunpack.c.0.s8 %v1681
        %v1683 = vlaneseq
        %v1684 = vshrl.u32 %v1683, 7
        %v1685 = vsub.s32 %v1682, %v1684
        %v1686 = vrot.slane %v1679, %v1685
        %v1687 = vcombine.low %v1659, %v1666
        %v1689 = vunpack.c.l.s4 1983009808
        %v1690 = vunpack.c.0.s8 %v1689
        %v1691 = vlaneseq
        %v1692 = vshrl.u32 %v1691, 7
        %v1693 = vsub.s32 %v1690, %v1692
        %v1694 = vrot.slane %v1687, %v1693
        %v1695 = vcombine.low %v1669, %v1670
        %v1697 = vunpack.c.l.s4 1983009808
        %v1698 = vunpack.c.0.s8 %v1697
        %v1699 = vlaneseq
        %v1700 = vshrl.u32 %v1699, 7
        %v1701 = vsub.s32 %v1698, %v1700
        %v1702 = vrot.slane %v1695, %v1701
        %v1703 = vcombine.low %v1678, %v1686
        %v1704 = vcombine.high %v1678, %v1686
        %v1706 = vunpack.c.l.s4 1934713408
        %v1707 = vunpack.c.0.s8 %v1706
        %v1708 = vlaneseq
        %v1709 = vshrl.u32 %v1708, 7
        %v1710 = vsub.s32 %v1707, %v1709
        %v1711 = vrot.slane %v1703, %v1710
        %v1713 = vunpack.c.l.s4 1934713408
        %v1714 = vunpack.c.0.s8 %v1713
        %v1715 = vlaneseq
        %v1716 = vshrl.u32 %v1715, 7
        %v1717 = vsub.s32 %v1714, %v1716
        %v1718 = vrot.slane %v1704, %v1717
        %v1719 = vcombine.low %v1694, %v1702
        %v1720 = vcombine.high %v1694, %v1702
        %v1722 = vunpack.c.l.s4 1934713408
        %v1723 = vunpack.c.0.s8 %v1722
        %v1724 = vlaneseq
        %v1725 = vshrl.u32 %v1724, 7
        %v1726 = vsub.s32 %v1723, %v1725
        %v1727 = vrot.slane %v1719, %v1726
        %v1729 = vunpack.c.l.s4 1934713408
        %v1730 = vunpack.c.0.s8 %v1729
        %v1731 = vlaneseq
        %v1732 = vshrl.u32 %v1731, 7
        %v1733 = vsub.s32 %v1730, %v1732
        %v1734 = vrot.slane %v1720, %v1733
        %v1735 = vcombine.low %v1711, %v1727
        %v1736 = vcombine.high %v1711, %v1727
        %v1737 = vcombine.low %v1718, %v1734
        %v1738 = vcombine.high %v1718, %v1734
        %1740 = vrot.lane.b32.xlu0 %v1736, 8
        %v1741 = vpop.permute.xlu0 %1740
        %1744 = vrot.lane.b32.xlu0 %v1737, 16
        %v1745 = vpop.permute.xlu0 %1744
        %1748 = vrot.lane.b32.xlu0 %v1738, 24
        %v1749 = vpop.permute.xlu0 %1748
        %v1751 = vsel %vm958, %v1735, %v1741
        %vm1752 = vcmask 130048
        %v1753 = vsel %vm1752, %v1751, %v1745
        %vm1754 = vcmask 195584
        %v1755 = vsel %vm1754, %v1753, %v1749
        %v1756 = vld [vmem:[%s5] sm:$0xff]
        %v1757 = vld [vmem:[%s5 + $0x8] sm:$0xff]
        %v1758 = vld [vmem:[%s5 + $0x10] sm:$0xff]
        %v1759 = vld [vmem:[%s5 + $0x18] sm:$0xff]
        %v1760 = vld [vmem:[%s6] sm:$0x1]
        %v1762 = vlaneseq
        %v1763 = vshrl.u32 %v1762, 7
        %v1764 = vsub.s32 0, %v1763
        %v1765 = vrot.slane %v1760, %v1764
        %v1768 = vsel %vm721, %v1755, 0
        %v1771 = vsel %vm721, %v1756, 0
        %v1774 = vsel %vm721, %v1757, 0
        %v1777 = vsel %vm721, %v1758, 0
        %v1780 = vsel %vm721, %v1759, 0
        %1782 = vmatprep.subr.mxu0 0.0
        %1783 = vmatpush1.xpose.msra.mxu0 %v1771
        %1784 = vmatprep.subr.mxu0 0.0
        %1785 = vmatpush1.xpose.msra.mxu0 %v1774
        %1786 = vmatprep.subr.mxu0 0.0
        %1787 = vmatpush1.xpose.msra.mxu0 %v1777
        %1788 = vmatprep.subr.mxu0 0.0
        %1789 = vmatpush1.xpose.msra.mxu0 %v1780
        %1790 = vmatprep.subr.mxu0 0.0
        %1791 = vmatpush1.xpose.msra.mxu0 0.0
        %1792 = vmatprep.subr.mxu0 0.0
        %1793 = vmatpush1.xpose.msra.mxu0 0.0
        %1794 = vmatprep.subr.mxu0 0.0
        %1795 = vmatpush1.xpose.msra.mxu0 0.0
        %1796 = vmatprep.subr.mxu0 0.0
        %1797 = vmatpush1.xpose.msra.mxu0 0.0
        %1798 = vmatprep.subr.mxu0 0.0
        %1799 = vmatpush1.xpose.msra.mxu0 0.0
        %1800 = vmatprep.subr.mxu0 0.0
        %1801 = vmatpush1.xpose.msra.mxu0 0.0
        %1802 = vmatprep.subr.mxu0 0.0
        %1803 = vmatpush1.xpose.msra.mxu0 0.0
        %1804 = vmatprep.subr.mxu0 0.0
        %1805 = vmatpush1.xpose.msra.mxu0 0.0
        %1806 = vmatprep.subr.mxu0 0.0
        %1807 = vmatpush1.xpose.msra.mxu0 0.0
        %1808 = vmatprep.subr.mxu0 0.0
        %1809 = vmatpush1.xpose.msra.mxu0 0.0
        %1810 = vmatprep.subr.mxu0 0.0
        %1811 = vmatpush1.xpose.msra.mxu0 0.0
        %1812 = vmatprep.subr.mxu0 0.0
        %1813 = vmatpush1.xpose.msra.mxu0 0.0
        %1814 = vmatprep.subr.mxu0 0.0
        %1815 = vmatpush1.xpose.msra.mxu0 0.0
        %1816 = vmatprep.subr.mxu0 0.0
        %1817 = vmatpush1.xpose.msra.mxu0 0.0
        %1818 = vmatprep.subr.mxu0 0.0
        %1819 = vmatpush1.xpose.msra.mxu0 0.0
        %1820 = vmatprep.subr.mxu0 0.0
        %1821 = vmatpush1.xpose.msra.mxu0 0.0
        %1822 = vmatprep.subr.mxu0 0.0
        %1823 = vmatpush1.xpose.msra.mxu0 0.0
        %1824 = vmatprep.subr.mxu0 0.0
        %1825 = vmatpush1.xpose.msra.mxu0 0.0
        %1826 = vmatprep.subr.mxu0 0.0
        %1827 = vmatpush1.xpose.msra.mxu0 0.0
        %1828 = vmatprep.subr.mxu0 0.0
        %1829 = vmatpush1.xpose.msra.mxu0 0.0
        %1830 = vmatprep.subr.mxu0 0.0
        %1831 = vmatpush1.xpose.msra.mxu0 0.0
        %1832 = vmatprep.subr.mxu0 0.0
        %1833 = vmatpush1.xpose.msra.mxu0 0.0
        %1834 = vmatprep.subr.mxu0 0.0
        %1835 = vmatpush1.xpose.msra.mxu0 0.0
        %1836 = vmatprep.subr.mxu0 0.0
        %1837 = vmatpush1.xpose.msra.mxu0 0.0
        %1838 = vmatprep.subr.mxu0 0.0
        %1839 = vmatpush1.xpose.msra.mxu0 0.0
        %1840 = vmatprep.subr.mxu0 0.0
        %1841 = vmatpush1.xpose.msra.mxu0 0.0
        %1842 = vmatprep.subr.mxu0 0.0
        %1843 = vmatpush1.xpose.msra.mxu0 0.0
        %1844 = vmatprep.subr.mxu0 0.0
        %1845 = vmatpush1.xpose.msra.mxu0 0.0
        %1846 = vmatprep.mubr.f32.mxu0 0.0
        %1847 = vmatmul.mubr.f32.gmra.mrb[0].mxu0 %v1768
        %v1848 = vpop.f32.mrb[0].mxu0
        %v1849 = vadd.f32 %v1765, %v1848
        %v1850 = vpop.f32.mrb[0].mxu0
        %1851 = vdwg.mxu0
        %1852 = vst.msk [vmem:[%s283] sm:$0xff] %vm721, %v1849
        %s1853 = sand.u32 %s195, 1
        %s1854 = scalar_lea.sflag [#allocation5], %s1853
        %s1855 = sand.u32 %s195, 1
        %s1856 = smul.addr %s1855, 8
        %s1857 = scalar_lea.vmem [#allocation4], %s1856
        // Predicated region
        $region53: #{tpu_custom_call.1} parent=47 // pred_check
          %p1858 = pneg %p205
        $region54: #{tpu_custom_call.1} parent=47 // pred_check_branch
          %1860 = sbr.rel (%p1858) target = $region56
        $region55: #{tpu_custom_call.1} parent=47 // pred_region
          %s1862 = ssub.s32 128, 128
          %1863 = vsyncadd %s1854, %s1862
          %s1864 = sadd.s32 %s26, %s25
          %s1865 = smul.addr %s1864, 128
          %s1866 = scalar_lea.hbm %s7, %s1865
          %s1868 = sshll.u32 %s1857, 4
          %s1869 = int_to_ptr.vmem [resolvable:$true] %s1868
          %1871 = dma.vmem_to_hbm [thread:$0]  %s1869, 128, %s1866, %s1854
        $region56: #{tpu_custom_call.1} parent=47 // pred_fallthru
          _
      $region48: #{tpu_custom_call.1} parent=5 // pred_fallthru
        _
      %p1872 = scmp.le.s32.totalorder 2, %s16
      // Predicated region
      $region57: #{tpu_custom_call.1} parent=5 // pred_check
        %p1873 = pneg %p1872
      $region58: #{tpu_custom_call.1} parent=5 // pred_check_branch
        %1875 = sbr.rel (%p1873) target = $region60
      $region59: #{tpu_custom_call.1} parent=5 // pred_region
        %s1876 = ssub.s32 %s16, 2
        // Predicated region
        $region61: #{tpu_custom_call.1} parent=59 // pred_check
          %p1877 = pneg %p211
        $region62: #{tpu_custom_call.1} parent=59 // pred_check_branch
          %1879 = sbr.rel (%p1877) target = $region64
        $region63: #{tpu_custom_call.1} parent=59 // pred_region
          %s1880 = sand.u32 %s196, 1
          %s1881 = scalar_lea.sflag [#allocation5], %s1880
          %s1882 = sand.u32 %s196, 1
          %s1883 = smul.addr %s1882, 8
          %s1884 = scalar_lea.vmem [#allocation4], %s1883
          %1885 = dma.done %s1881, 128
        $region64: #{tpu_custom_call.1} parent=59 // pred_fallthru
          _
      $region60: #{tpu_custom_call.1} parent=5 // pred_fallthru
        _
    $region6: #{tpu_custom_call.1} parent=1 // loop_footer
      %s20 = sadd.s32 1, %s16
    $region7: #{tpu_custom_call.1} parent=1 // loop_footer_branch
      %15 = sbr.rel target = $region3
    $region8: #{tpu_custom_call.1} parent=1 // loop_exit
      _
    %1886 = vsyncpa [#allocation5], 1
    %s1887 = scalar_lea.sflag [#allocation5], 1
    %1888 = vsyncpa %s1887, 1

</llo_original>
